<compile_context>
chip_gen: v7x
topology: tpu7x:2x2x1
jax: 0.10.0
libtpu: 0.0.40
codegen_flags: <defaults>
</compile_context>

<pallas_src>
import functools

import jax
import jax.numpy as jnp
from jax.experimental import pallas as pl
from jax.experimental.pallas import tpu as pltpu


# ----------------------------- Pallas kernel --------------------------------
def _realnvp_kernel(xa_ref, xb_ref, c_ref,
                    w1x_ref, w1c_ref, b1_ref,
                    w2_ref, b2_ref,
                    w3s_ref, b3s_ref, w3t_ref, b3t_ref,
                    xa_out_ref, xb_out_ref, ld_ref,
                    *, n_flows):
    # Feature-major layout: batch on lanes -> lane-dense elementwise ops,
    # full-lane MXU output columns and unmasked stores.
    x_a = xa_ref[...]                          # (n_half,  bt)
    x_b = xb_ref[...]                          # (n_half,  bt)
    c = c_ref[...]                             # (cond_dim, bt)
    log_det = jnp.zeros(ld_ref.shape, ld_ref.dtype)

    # n_flows is small (3): static unroll keeps the whole flow chain in vregs.
    # TODO(synk): switch to lax.fori_loop(..., unroll=True) if n_flows grows
    # beyond ~4-8 to bound vreg live ranges.
    for k in range(n_flows):
        # fc1 on concat([x_a, c]) expressed as two matmuls on the pre-split,
        # pre-transposed weights (no in-kernel slice or concat).
        h1 = (jnp.dot(w1x_ref[k], x_a, preferred_element_type=jnp.float32)
              + jnp.dot(w1c_ref[k], c, preferred_element_type=jnp.float32)
              + b1_ref[k])                     # (H, bt)
        h1 = jnp.maximum(h1, 0.0)              # relu(fc1)

        h2 = (jnp.dot(w2_ref[k], h1, preferred_element_type=jnp.float32)
              + b2_ref[k])                     # (H, bt)
        h2 = jnp.maximum(h2, 0.0)              # relu(fc2)

        # Separate s / t heads: avoids the sublane slice at a
        # non-multiple-of-8 offset that a fused [s|t] head would require.
        s = jnp.tanh(jnp.dot(w3s_ref[k], h2, preferred_element_type=jnp.float32)
                     + b3s_ref[k])             # (n_half, bt)
        t = (jnp.dot(w3t_ref[k], h2, preferred_element_type=jnp.float32)
             + b3t_ref[k])                     # (n_half, bt)

        xb_new = jnp.exp(s) * x_b + t
        log_det = log_det + s
        # x <- cat([x_b_new, x_a]) expressed as a role swap (no data movement).
        x_a, x_b = xb_new, x_a

    # Lane-dense, unmasked final stores.
    xa_out_ref[...] = x_a
    xb_out_ref[...] = x_b
    ld_ref[...] = log_det


# ------------------------------ wrapper --------------------------------------
def _pick_batch_tile(B):
    """Lane-dense batch tiles: multiples of 128, >=2 programs on large
    batches (v7x dual-TC sharding), capped at 2048 lanes to amortize the
    ~0.35us/grid-step overhead while staying far inside 64 MiB VMEM."""
    if B < 256 or B % 128 != 0:
        return B
    bt = min(B // 2, 2048)
    bt -= bt % 128
    while bt >= 128 and B % bt != 0:
        bt -= 128
    return bt if bt >= 128 else B


def conditional_realnvp_forward(x, c, params, *, n_flows, n_half, batch_tile=None):
    """x: (B, data_dim), c: (B, cond_dim) -> (x_out, log_det_jacobian)."""
    B, data_dim = x.shape
    cond_dim = c.shape[1]
    n_hidden = params["w2"].shape[1]

    bt = batch_tile if batch_tile is not None else _pick_batch_tile(B)
    assert B % bt == 0 and (bt == B or bt % 128 == 0), "bad batch tile"
    grid = (B // bt,)

    # ---- wrapper-side layout plumbing (keeps the kernel slice/concat-free) ----
    x_a_in = jnp.transpose(x[:, :n_half])          # (n_half,  B)
    x_b_in = jnp.transpose(x[:, n_half:])          # (n_half,  B)
    c_in = jnp.transpose(c)                        # (cond_dim, B)

    tr = lambda w: jnp.transpose(w, (0, 2, 1))
    w1x = tr(params["w1"][:, :n_half, :])          # (F, H, n_half)
    w1c = tr(params["w1"][:, n_half:, :])          # (F, H, cond_dim)
    w2 = tr(params["w2"])                          # (F, H, H)
    w3s = tr(params["w3s"])                        # (F, n_half, H)
    w3t = tr(params["w3t"])                        # (F, n_half, H)
    b1 = tr(params["b1"])                          # (F, H, 1)
    b2 = tr(params["b2"])                          # (F, H, 1)
    b3s = tr(params["b3s"])                        # (F, n_half, 1)
    b3t = tr(params["b3t"])                        # (F, n_half, 1)

    def act_spec(d):     # batch on lanes; one "parallel" tile axis
        return pl.BlockSpec((d, bt), lambda i: (0, i))

    def weight_spec(a):  # fully resident; same block for every grid step
        return pl.BlockSpec(a.shape, lambda i: (0,) * a.ndim)

    kernel = functools.partial(_realnvp_kernel, n_flows=n_flows)

    x_a_out, x_b_out, ld_out = pl.pallas_call(
        kernel,
        out_shape=(
            jax.ShapeDtypeStruct((n_half, B), jnp.float32),
            jax.ShapeDtypeStruct((n_half, B), jnp.float32),
            jax.ShapeDtypeStruct((n_half, B), jnp.float32),
        ),
        grid_spec=pltpu.PrefetchScalarGridSpec(
            num_scalar_prefetch=0,
            grid=grid,
            in_specs=[
                act_spec(n_half),               # x_a
                act_spec(n_half),               # x_b
                act_spec(cond_dim),             # c
                weight_spec(w1x), weight_spec(w1c), weight_spec(b1),
                weight_spec(w2), weight_spec(b2),
                weight_spec(w3s), weight_spec(b3s),
                weight_spec(w3t), weight_spec(b3t),
            ],
            out_specs=(
                act_spec(n_half),               # x_a out
                act_spec(n_half),               # x_b out
                act_spec(n_half),               # log_det
            ),
        ),
        compiler_params=pltpu.CompilerParams(
            dimension_semantics=("parallel",)),  # batch tiles independent
    )(x_a_in, x_b_in, c_in, w1x, w1c, b1, w2, b2, w3s, b3s, w3t, b3t)

    # Back to the module's (B, data_dim) / (B, n_half) layout.
    x_out = jnp.transpose(jnp.concatenate([x_a_out, x_b_out], axis=0))
    log_det = jnp.transpose(ld_out)
    return x_out, log_det


# --------------------------- pure-JAX reference -------------------------------
def reference_forward(x, c, params, *, n_flows, n_half):
    log_det = jnp.zeros((x.shape[0], n_half), jnp.float32)
    for k in range(n_flows):
        x_a = x[:, :n_half]
        x_b = x[:, n_half:]
        xac = jnp.concatenate([x_a, c], axis=1)
        h1 = jax.nn.relu(xac @ params["w1"][k] + params["b1"][k, 0])
        h2 = jax.nn.relu(h1 @ params["w2"][k] + params["b2"][k, 0])
        s = jnp.tanh(h2 @ params["w3s"][k] + params["b3s"][k, 0])
        t = h2 @ params["w3t"][k] + params["b3t"][k, 0]
        x_b = jnp.exp(s) * x_b + t
        x = jnp.concatenate([x_b, x_a], axis=1)
        log_det = log_det + s
    return x, log_det


# ------------------------------- main -----------------------------------------
if __name__ == "__main__":
    # Small shapes consistent with the module.
    n_flows = 3
    condition_dim = 6
    data_dim = 8          # data_dim % 2 == 0
    n_hidden = 32
    n_half = data_dim // 2
    n_in = n_half + condition_dim

    key = jax.random.PRNGKey(0)
    keys = jax.random.split(key, 12)

    def init(k, shape, scale):
        return (scale * jax.random.normal(k, shape)).astype(jnp.float32)

    # Deterministic, synthetic parameter init (stacked over flows).
    params = {
        "w1":  init(keys[0], (n_flows, n_in, n_hidden),     1.0 / jnp.sqrt(n_in)),
        "b1":  init(keys[1], (n_flows, 1, n_hidden),         0.1),
        "w2":  init(keys[2], (n_flows, n_hidden, n_hidden), 1.0 / jnp.sqrt(n_hidden)),
        "b2":  init(keys[3], (n_flows, 1, n_hidden),         0.1),
        "w3s": init(keys[4], (n_flows, n_hidden, n_half),   1.0 / jnp.sqrt(n_hidden)),
        "b3s": init(keys[5], (n_flows, 1, n_half),           0.1),
        "w3t": init(keys[6], (n_flows, n_hidden, n_half),   1.0 / jnp.sqrt(n_hidden)),
        "b3t": init(keys[7], (n_flows, 1, n_half),           0.1),
    }

    # ---- toy batch (single program) ----
    batch = 4
    x = jax.random.normal(keys[8], (batch, data_dim), dtype=jnp.float32)
    c = jax.random.normal(keys[9], (batch, condition_dim), dtype=jnp.float32)

    x_out, log_det = conditional_realnvp_forward(
        x, c, params, n_flows=n_flows, n_half=n_half)
    jax.block_until_ready((x_out, log_det))

    x_ref, ld_ref = reference_forward(x, c, params, n_flows=n_flows, n_half=n_half)
    assert x_out.shape == (batch, data_dim)
    assert log_det.shape == (batch, n_half)
    assert jnp.allclose(x_out, x_ref, atol=1e-5, rtol=1e-5)
    assert jnp.allclose(log_det, ld_ref, atol=1e-5, rtol=1e-5)

    # ---- modest batch exercising the tiled (>=2 program) path ----
    batch2 = 256
    x2 = jax.random.normal(keys[10], (batch2, data_dim), dtype=jnp.float32)
    c2 = jax.random.normal(keys[11], (batch2, condition_dim), dtype=jnp.float32)
    x2_out, ld2_out = conditional_realnvp_forward(
        x2, c2, params, n_flows=n_flows, n_half=n_half)
    jax.block_until_ready((x2_out, ld2_out))
    x2_ref, ld2_ref = reference_forward(x2, c2, params, n_flows=n_flows, n_half=n_half)
    assert jnp.allclose(x2_out, x2_ref, atol=1e-5, rtol=1e-5)
    assert jnp.allclose(ld2_out, ld2_ref, atol=1e-5, rtol=1e-5)

    print("KERNEL_OK")
</pallas_src>

<mosaic_0001>
module attributes {stable_mosaic.version = 11 : i64} {
  func.func @_realnvp_kernel(%arg0: i32, %arg1: memref<4x4xf32, #tpu.memory_space<vmem>>, %arg2: memref<4x4xf32, #tpu.memory_space<vmem>>, %arg3: memref<6x4xf32, #tpu.memory_space<vmem>>, %arg4: memref<3x32x4xf32, #tpu.memory_space<vmem>>, %arg5: memref<3x32x6xf32, #tpu.memory_space<vmem>>, %arg6: memref<3x32x1xf32, #tpu.memory_space<vmem>>, %arg7: memref<3x32x32xf32, #tpu.memory_space<vmem>>, %arg8: memref<3x32x1xf32, #tpu.memory_space<vmem>>, %arg9: memref<3x4x32xf32, #tpu.memory_space<vmem>>, %arg10: memref<3x4x1xf32, #tpu.memory_space<vmem>>, %arg11: memref<3x4x32xf32, #tpu.memory_space<vmem>>, %arg12: memref<3x4x1xf32, #tpu.memory_space<vmem>>, %arg13: memref<4x4xf32, #tpu.memory_space<vmem>>, %arg14: memref<4x4xf32, #tpu.memory_space<vmem>>, %arg15: memref<4x4xf32, #tpu.memory_space<vmem>>) attributes {dimension_semantics = [#tpu.dimension_semantics<parallel>], iteration_bounds = array<i64: 1>, scalar_prefetch = 0 : i64, scratch_operands = 0 : i64, tpu.core_type = #tpu.core_type<tc>, window_params = [{transform_indices = @transform_0, window_bounds = array<i64: 4, 4>}, {transform_indices = @transform_1, window_bounds = array<i64: 4, 4>}, {transform_indices = @transform_2, window_bounds = array<i64: 6, 4>}, {pipeline_mode = #tpu.pipeline_mode<synchronous>, transform_indices = @transform_3, window_bounds = array<i64: 3, 32, 4>}, {pipeline_mode = #tpu.pipeline_mode<synchronous>, transform_indices = @transform_4, window_bounds = array<i64: 3, 32, 6>}, {pipeline_mode = #tpu.pipeline_mode<synchronous>, transform_indices = @transform_5, window_bounds = array<i64: 3, 32, 1>}, {pipeline_mode = #tpu.pipeline_mode<synchronous>, transform_indices = @transform_6, window_bounds = array<i64: 3, 32, 32>}, {pipeline_mode = #tpu.pipeline_mode<synchronous>, transform_indices = @transform_7, window_bounds = array<i64: 3, 32, 1>}, {pipeline_mode = #tpu.pipeline_mode<synchronous>, transform_indices = @transform_8, window_bounds = array<i64: 3, 4, 32>}, {pipeline_mode = #tpu.pipeline_mode<synchronous>, transform_indices = @transform_9, window_bounds = array<i64: 3, 4, 1>}, {pipeline_mode = #tpu.pipeline_mode<synchronous>, transform_indices = @transform_10, window_bounds = array<i64: 3, 4, 32>}, {pipeline_mode = #tpu.pipeline_mode<synchronous>, transform_indices = @transform_11, window_bounds = array<i64: 3, 4, 1>}, {transform_indices = @transform_12, window_bounds = array<i64: 4, 4>}, {transform_indices = @transform_13, window_bounds = array<i64: 4, 4>}, {transform_indices = @transform_14, window_bounds = array<i64: 4, 4>}]} {
    %c0 = arith.constant 0 : index
    %c0_0 = arith.constant 0 : index
    %0 = vector.load %arg1[%c0, %c0_0] : memref<4x4xf32, #tpu.memory_space<vmem>>, vector<4x4xf32>
    %c0_1 = arith.constant 0 : index
    %c0_2 = arith.constant 0 : index
    %1 = vector.load %arg2[%c0_1, %c0_2] : memref<4x4xf32, #tpu.memory_space<vmem>>, vector<4x4xf32>
    %c0_3 = arith.constant 0 : index
    %c0_4 = arith.constant 0 : index
    %2 = vector.load %arg3[%c0_3, %c0_4] : memref<6x4xf32, #tpu.memory_space<vmem>>, vector<6x4xf32>
    %cst = arith.constant 0.000000e+00 : f32
    %3 = vector.broadcast %cst : f32 to vector<4x4xf32>
    %c0_5 = arith.constant 0 : index
    %c0_6 = arith.constant 0 : index
    %c0_7 = arith.constant 0 : index
    %4 = vector.load %arg4[%c0_5, %c0_6, %c0_7] : memref<3x32x4xf32, #tpu.memory_space<vmem>>, vector<1x32x4xf32>
    %5 = vector.shape_cast %4 : vector<1x32x4xf32> to vector<32x4xf32>
    %cst_8 = arith.constant dense<0.000000e+00> : vector<32x4xf32>
    %6 = tpu.matmul %5, %0, %cst_8 {dimension_numbers = #tpu.dot_dimension_numbers<[1], [0], [0], [1], [0, 0, 1, 1], [], []>} : vector<32x4xf32>, vector<4x4xf32>, vector<32x4xf32> -> vector<32x4xf32>
    %c0_9 = arith.constant 0 : index
    %c0_10 = arith.constant 0 : index
    %c0_11 = arith.constant 0 : index
    %7 = vector.load %arg5[%c0_9, %c0_10, %c0_11] : memref<3x32x6xf32, #tpu.memory_space<vmem>>, vector<1x32x6xf32>
    %8 = vector.shape_cast %7 : vector<1x32x6xf32> to vector<32x6xf32>
    %cst_12 = arith.constant dense<0.000000e+00> : vector<32x4xf32>
    %9 = tpu.matmul %8, %2, %cst_12 {dimension_numbers = #tpu.dot_dimension_numbers<[1], [0], [0], [1], [0, 0, 1, 1], [], []>} : vector<32x6xf32>, vector<6x4xf32>, vector<32x4xf32> -> vector<32x4xf32>
    %10 = arith.addf %6, %9 : vector<32x4xf32>
    %c0_13 = arith.constant 0 : index
    %c0_14 = arith.constant 0 : index
    %c0_15 = arith.constant 0 : index
    %11 = vector.load %arg6[%c0_13, %c0_14, %c0_15] : memref<3x32x1xf32, #tpu.memory_space<vmem>>, vector<1x32x1xf32>
    %12 = vector.shape_cast %11 : vector<1x32x1xf32> to vector<32x1xf32>
    %13 = vector.broadcast %12 : vector<32x1xf32> to vector<32x4xf32>
    %14 = arith.addf %10, %13 : vector<32x4xf32>
    %cst_16 = arith.constant 0.000000e+00 : f32
    %15 = vector.broadcast %cst_16 : f32 to vector<32x4xf32>
    %16 = arith.maximumf %14, %15 : vector<32x4xf32>
    %c0_17 = arith.constant 0 : index
    %c0_18 = arith.constant 0 : index
    %c0_19 = arith.constant 0 : index
    %17 = vector.load %arg7[%c0_17, %c0_18, %c0_19] : memref<3x32x32xf32, #tpu.memory_space<vmem>>, vector<1x32x32xf32>
    %18 = vector.shape_cast %17 : vector<1x32x32xf32> to vector<32x32xf32>
    %cst_20 = arith.constant dense<0.000000e+00> : vector<32x4xf32>
    %19 = tpu.matmul %18, %16, %cst_20 {dimension_numbers = #tpu.dot_dimension_numbers<[1], [0], [0], [1], [0, 0, 1, 1], [], []>} : vector<32x32xf32>, vector<32x4xf32>, vector<32x4xf32> -> vector<32x4xf32>
    %c0_21 = arith.constant 0 : index
    %c0_22 = arith.constant 0 : index
    %c0_23 = arith.constant 0 : index
    %20 = vector.load %arg8[%c0_21, %c0_22, %c0_23] : memref<3x32x1xf32, #tpu.memory_space<vmem>>, vector<1x32x1xf32>
    %21 = vector.shape_cast %20 : vector<1x32x1xf32> to vector<32x1xf32>
    %22 = vector.broadcast %21 : vector<32x1xf32> to vector<32x4xf32>
    %23 = arith.addf %19, %22 : vector<32x4xf32>
    %cst_24 = arith.constant 0.000000e+00 : f32
    %24 = vector.broadcast %cst_24 : f32 to vector<32x4xf32>
    %25 = arith.maximumf %23, %24 : vector<32x4xf32>
    %c0_25 = arith.constant 0 : index
    %c0_26 = arith.constant 0 : index
    %c0_27 = arith.constant 0 : index
    %26 = vector.load %arg9[%c0_25, %c0_26, %c0_27] : memref<3x4x32xf32, #tpu.memory_space<vmem>>, vector<1x4x32xf32>
    %27 = vector.shape_cast %26 : vector<1x4x32xf32> to vector<4x32xf32>
    %cst_28 = arith.constant dense<0.000000e+00> : vector<4x4xf32>
    %28 = tpu.matmul %27, %25, %cst_28 {dimension_numbers = #tpu.dot_dimension_numbers<[1], [0], [0], [1], [0, 0, 1, 1], [], []>} : vector<4x32xf32>, vector<32x4xf32>, vector<4x4xf32> -> vector<4x4xf32>
    %c0_29 = arith.constant 0 : index
    %c0_30 = arith.constant 0 : index
    %c0_31 = arith.constant 0 : index
    %29 = vector.load %arg10[%c0_29, %c0_30, %c0_31] : memref<3x4x1xf32, #tpu.memory_space<vmem>>, vector<1x4x1xf32>
    %30 = vector.shape_cast %29 : vector<1x4x1xf32> to vector<4x1xf32>
    %31 = vector.broadcast %30 : vector<4x1xf32> to vector<4x4xf32>
    %32 = arith.addf %28, %31 : vector<4x4xf32>
    %33 = math.tanh %32 : vector<4x4xf32>
    %c0_32 = arith.constant 0 : index
    %c0_33 = arith.constant 0 : index
    %c0_34 = arith.constant 0 : index
    %34 = vector.load %arg11[%c0_32, %c0_33, %c0_34] : memref<3x4x32xf32, #tpu.memory_space<vmem>>, vector<1x4x32xf32>
    %35 = vector.shape_cast %34 : vector<1x4x32xf32> to vector<4x32xf32>
    %cst_35 = arith.constant dense<0.000000e+00> : vector<4x4xf32>
    %36 = tpu.matmul %35, %25, %cst_35 {dimension_numbers = #tpu.dot_dimension_numbers<[1], [0], [0], [1], [0, 0, 1, 1], [], []>} : vector<4x32xf32>, vector<32x4xf32>, vector<4x4xf32> -> vector<4x4xf32>
    %c0_36 = arith.constant 0 : index
    %c0_37 = arith.constant 0 : index
    %c0_38 = arith.constant 0 : index
    %37 = vector.load %arg12[%c0_36, %c0_37, %c0_38] : memref<3x4x1xf32, #tpu.memory_space<vmem>>, vector<1x4x1xf32>
    %38 = vector.shape_cast %37 : vector<1x4x1xf32> to vector<4x1xf32>
    %39 = vector.broadcast %38 : vector<4x1xf32> to vector<4x4xf32>
    %40 = arith.addf %36, %39 : vector<4x4xf32>
    %41 = math.exp %33 : vector<4x4xf32>
    %42 = arith.mulf %41, %1 : vector<4x4xf32>
    %43 = arith.addf %42, %40 : vector<4x4xf32>
    %44 = arith.addf %3, %33 : vector<4x4xf32>
    %c1 = arith.constant 1 : index
    %c0_39 = arith.constant 0 : index
    %c0_40 = arith.constant 0 : index
    %45 = vector.load %arg4[%c1, %c0_39, %c0_40] : memref<3x32x4xf32, #tpu.memory_space<vmem>>, vector<1x32x4xf32>
    %46 = vector.shape_cast %45 : vector<1x32x4xf32> to vector<32x4xf32>
    %cst_41 = arith.constant dense<0.000000e+00> : vector<32x4xf32>
    %47 = tpu.matmul %46, %43, %cst_41 {dimension_numbers = #tpu.dot_dimension_numbers<[1], [0], [0], [1], [0, 0, 1, 1], [], []>} : vector<32x4xf32>, vector<4x4xf32>, vector<32x4xf32> -> vector<32x4xf32>
    %c1_42 = arith.constant 1 : index
    %c0_43 = arith.constant 0 : index
    %c0_44 = arith.constant 0 : index
    %48 = vector.load %arg5[%c1_42, %c0_43, %c0_44] : memref<3x32x6xf32, #tpu.memory_space<vmem>>, vector<1x32x6xf32>
    %49 = vector.shape_cast %48 : vector<1x32x6xf32> to vector<32x6xf32>
    %cst_45 = arith.constant dense<0.000000e+00> : vector<32x4xf32>
    %50 = tpu.matmul %49, %2, %cst_45 {dimension_numbers = #tpu.dot_dimension_numbers<[1], [0], [0], [1], [0, 0, 1, 1], [], []>} : vector<32x6xf32>, vector<6x4xf32>, vector<32x4xf32> -> vector<32x4xf32>
    %51 = arith.addf %47, %50 : vector<32x4xf32>
    %c1_46 = arith.constant 1 : index
    %c0_47 = arith.constant 0 : index
    %c0_48 = arith.constant 0 : index
    %52 = vector.load %arg6[%c1_46, %c0_47, %c0_48] : memref<3x32x1xf32, #tpu.memory_space<vmem>>, vector<1x32x1xf32>
    %53 = vector.shape_cast %52 : vector<1x32x1xf32> to vector<32x1xf32>
    %54 = vector.broadcast %53 : vector<32x1xf32> to vector<32x4xf32>
    %55 = arith.addf %51, %54 : vector<32x4xf32>
    %cst_49 = arith.constant 0.000000e+00 : f32
    %56 = vector.broadcast %cst_49 : f32 to vector<32x4xf32>
    %57 = arith.maximumf %55, %56 : vector<32x4xf32>
    %c1_50 = arith.constant 1 : index
    %c0_51 = arith.constant 0 : index
    %c0_52 = arith.constant 0 : index
    %58 = vector.load %arg7[%c1_50, %c0_51, %c0_52] : memref<3x32x32xf32, #tpu.memory_space<vmem>>, vector<1x32x32xf32>
    %59 = vector.shape_cast %58 : vector<1x32x32xf32> to vector<32x32xf32>
    %cst_53 = arith.constant dense<0.000000e+00> : vector<32x4xf32>
    %60 = tpu.matmul %59, %57, %cst_53 {dimension_numbers = #tpu.dot_dimension_numbers<[1], [0], [0], [1], [0, 0, 1, 1], [], []>} : vector<32x32xf32>, vector<32x4xf32>, vector<32x4xf32> -> vector<32x4xf32>
    %c1_54 = arith.constant 1 : index
    %c0_55 = arith.constant 0 : index
    %c0_56 = arith.constant 0 : index
    %61 = vector.load %arg8[%c1_54, %c0_55, %c0_56] : memref<3x32x1xf32, #tpu.memory_space<vmem>>, vector<1x32x1xf32>
    %62 = vector.shape_cast %61 : vector<1x32x1xf32> to vector<32x1xf32>
    %63 = vector.broadcast %62 : vector<32x1xf32> to vector<32x4xf32>
    %64 = arith.addf %60, %63 : vector<32x4xf32>
    %cst_57 = arith.constant 0.000000e+00 : f32
    %65 = vector.broadcast %cst_57 : f32 to vector<32x4xf32>
    %66 = arith.maximumf %64, %65 : vector<32x4xf32>
    %c1_58 = arith.constant 1 : index
    %c0_59 = arith.constant 0 : index
    %c0_60 = arith.constant 0 : index
    %67 = vector.load %arg9[%c1_58, %c0_59, %c0_60] : memref<3x4x32xf32, #tpu.memory_space<vmem>>, vector<1x4x32xf32>
    %68 = vector.shape_cast %67 : vector<1x4x32xf32> to vector<4x32xf32>
    %cst_61 = arith.constant dense<0.000000e+00> : vector<4x4xf32>
    %69 = tpu.matmul %68, %66, %cst_61 {dimension_numbers = #tpu.dot_dimension_numbers<[1], [0], [0], [1], [0, 0, 1, 1], [], []>} : vector<4x32xf32>, vector<32x4xf32>, vector<4x4xf32> -> vector<4x4xf32>
    %c1_62 = arith.constant 1 : index
    %c0_63 = arith.constant 0 : index
    %c0_64 = arith.constant 0 : index
    %70 = vector.load %arg10[%c1_62, %c0_63, %c0_64] : memref<3x4x1xf32, #tpu.memory_space<vmem>>, vector<1x4x1xf32>
    %71 = vector.shape_cast %70 : vector<1x4x1xf32> to vector<4x1xf32>
    %72 = vector.broadcast %71 : vector<4x1xf32> to vector<4x4xf32>
    %73 = arith.addf %69, %72 : vector<4x4xf32>
    %74 = math.tanh %73 : vector<4x4xf32>
    %c1_65 = arith.constant 1 : index
    %c0_66 = arith.constant 0 : index
    %c0_67 = arith.constant 0 : index
    %75 = vector.load %arg11[%c1_65, %c0_66, %c0_67] : memref<3x4x32xf32, #tpu.memory_space<vmem>>, vector<1x4x32xf32>
    %76 = vector.shape_cast %75 : vector<1x4x32xf32> to vector<4x32xf32>
    %cst_68 = arith.constant dense<0.000000e+00> : vector<4x4xf32>
    %77 = tpu.matmul %76, %66, %cst_68 {dimension_numbers = #tpu.dot_dimension_numbers<[1], [0], [0], [1], [0, 0, 1, 1], [], []>} : vector<4x32xf32>, vector<32x4xf32>, vector<4x4xf32> -> vector<4x4xf32>
    %c1_69 = arith.constant 1 : index
    %c0_70 = arith.constant 0 : index
    %c0_71 = arith.constant 0 : index
    %78 = vector.load %arg12[%c1_69, %c0_70, %c0_71] : memref<3x4x1xf32, #tpu.memory_space<vmem>>, vector<1x4x1xf32>
    %79 = vector.shape_cast %78 : vector<1x4x1xf32> to vector<4x1xf32>
    %80 = vector.broadcast %79 : vector<4x1xf32> to vector<4x4xf32>
    %81 = arith.addf %77, %80 : vector<4x4xf32>
    %82 = math.exp %74 : vector<4x4xf32>
    %83 = arith.mulf %82, %0 : vector<4x4xf32>
    %84 = arith.addf %83, %81 : vector<4x4xf32>
    %85 = arith.addf %44, %74 : vector<4x4xf32>
    %c2 = arith.constant 2 : index
    %c0_72 = arith.constant 0 : index
    %c0_73 = arith.constant 0 : index
    %86 = vector.load %arg4[%c2, %c0_72, %c0_73] : memref<3x32x4xf32, #tpu.memory_space<vmem>>, vector<1x32x4xf32>
    %87 = vector.shape_cast %86 : vector<1x32x4xf32> to vector<32x4xf32>
    %cst_74 = arith.constant dense<0.000000e+00> : vector<32x4xf32>
    %88 = tpu.matmul %87, %84, %cst_74 {dimension_numbers = #tpu.dot_dimension_numbers<[1], [0], [0], [1], [0, 0, 1, 1], [], []>} : vector<32x4xf32>, vector<4x4xf32>, vector<32x4xf32> -> vector<32x4xf32>
    %c2_75 = arith.constant 2 : index
    %c0_76 = arith.constant 0 : index
    %c0_77 = arith.constant 0 : index
    %89 = vector.load %arg5[%c2_75, %c0_76, %c0_77] : memref<3x32x6xf32, #tpu.memory_space<vmem>>, vector<1x32x6xf32>
    %90 = vector.shape_cast %89 : vector<1x32x6xf32> to vector<32x6xf32>
    %cst_78 = arith.constant dense<0.000000e+00> : vector<32x4xf32>
    %91 = tpu.matmul %90, %2, %cst_78 {dimension_numbers = #tpu.dot_dimension_numbers<[1], [0], [0], [1], [0, 0, 1, 1], [], []>} : vector<32x6xf32>, vector<6x4xf32>, vector<32x4xf32> -> vector<32x4xf32>
    %92 = arith.addf %88, %91 : vector<32x4xf32>
    %c2_79 = arith.constant 2 : index
    %c0_80 = arith.constant 0 : index
    %c0_81 = arith.constant 0 : index
    %93 = vector.load %arg6[%c2_79, %c0_80, %c0_81] : memref<3x32x1xf32, #tpu.memory_space<vmem>>, vector<1x32x1xf32>
    %94 = vector.shape_cast %93 : vector<1x32x1xf32> to vector<32x1xf32>
    %95 = vector.broadcast %94 : vector<32x1xf32> to vector<32x4xf32>
    %96 = arith.addf %92, %95 : vector<32x4xf32>
    %cst_82 = arith.constant 0.000000e+00 : f32
    %97 = vector.broadcast %cst_82 : f32 to vector<32x4xf32>
    %98 = arith.maximumf %96, %97 : vector<32x4xf32>
    %c2_83 = arith.constant 2 : index
    %c0_84 = arith.constant 0 : index
    %c0_85 = arith.constant 0 : index
    %99 = vector.load %arg7[%c2_83, %c0_84, %c0_85] : memref<3x32x32xf32, #tpu.memory_space<vmem>>, vector<1x32x32xf32>
    %100 = vector.shape_cast %99 : vector<1x32x32xf32> to vector<32x32xf32>
    %cst_86 = arith.constant dense<0.000000e+00> : vector<32x4xf32>
    %101 = tpu.matmul %100, %98, %cst_86 {dimension_numbers = #tpu.dot_dimension_numbers<[1], [0], [0], [1], [0, 0, 1, 1], [], []>} : vector<32x32xf32>, vector<32x4xf32>, vector<32x4xf32> -> vector<32x4xf32>
    %c2_87 = arith.constant 2 : index
    %c0_88 = arith.constant 0 : index
    %c0_89 = arith.constant 0 : index
    %102 = vector.load %arg8[%c2_87, %c0_88, %c0_89] : memref<3x32x1xf32, #tpu.memory_space<vmem>>, vector<1x32x1xf32>
    %103 = vector.shape_cast %102 : vector<1x32x1xf32> to vector<32x1xf32>
    %104 = vector.broadcast %103 : vector<32x1xf32> to vector<32x4xf32>
    %105 = arith.addf %101, %104 : vector<32x4xf32>
    %cst_90 = arith.constant 0.000000e+00 : f32
    %106 = vector.broadcast %cst_90 : f32 to vector<32x4xf32>
    %107 = arith.maximumf %105, %106 : vector<32x4xf32>
    %c2_91 = arith.constant 2 : index
    %c0_92 = arith.constant 0 : index
    %c0_93 = arith.constant 0 : index
    %108 = vector.load %arg9[%c2_91, %c0_92, %c0_93] : memref<3x4x32xf32, #tpu.memory_space<vmem>>, vector<1x4x32xf32>
    %109 = vector.shape_cast %108 : vector<1x4x32xf32> to vector<4x32xf32>
    %cst_94 = arith.constant dense<0.000000e+00> : vector<4x4xf32>
    %110 = tpu.matmul %109, %107, %cst_94 {dimension_numbers = #tpu.dot_dimension_numbers<[1], [0], [0], [1], [0, 0, 1, 1], [], []>} : vector<4x32xf32>, vector<32x4xf32>, vector<4x4xf32> -> vector<4x4xf32>
    %c2_95 = arith.constant 2 : index
    %c0_96 = arith.constant 0 : index
    %c0_97 = arith.constant 0 : index
    %111 = vector.load %arg10[%c2_95, %c0_96, %c0_97] : memref<3x4x1xf32, #tpu.memory_space<vmem>>, vector<1x4x1xf32>
    %112 = vector.shape_cast %111 : vector<1x4x1xf32> to vector<4x1xf32>
    %113 = vector.broadcast %112 : vector<4x1xf32> to vector<4x4xf32>
    %114 = arith.addf %110, %113 : vector<4x4xf32>
    %115 = math.tanh %114 : vector<4x4xf32>
    %c2_98 = arith.constant 2 : index
    %c0_99 = arith.constant 0 : index
    %c0_100 = arith.constant 0 : index
    %116 = vector.load %arg11[%c2_98, %c0_99, %c0_100] : memref<3x4x32xf32, #tpu.memory_space<vmem>>, vector<1x4x32xf32>
    %117 = vector.shape_cast %116 : vector<1x4x32xf32> to vector<4x32xf32>
    %cst_101 = arith.constant dense<0.000000e+00> : vector<4x4xf32>
    %118 = tpu.matmul %117, %107, %cst_101 {dimension_numbers = #tpu.dot_dimension_numbers<[1], [0], [0], [1], [0, 0, 1, 1], [], []>} : vector<4x32xf32>, vector<32x4xf32>, vector<4x4xf32> -> vector<4x4xf32>
    %c2_102 = arith.constant 2 : index
    %c0_103 = arith.constant 0 : index
    %c0_104 = arith.constant 0 : index
    %119 = vector.load %arg12[%c2_102, %c0_103, %c0_104] : memref<3x4x1xf32, #tpu.memory_space<vmem>>, vector<1x4x1xf32>
    %120 = vector.shape_cast %119 : vector<1x4x1xf32> to vector<4x1xf32>
    %121 = vector.broadcast %120 : vector<4x1xf32> to vector<4x4xf32>
    %122 = arith.addf %118, %121 : vector<4x4xf32>
    %123 = math.exp %115 : vector<4x4xf32>
    %124 = arith.mulf %123, %43 : vector<4x4xf32>
    %125 = arith.addf %124, %122 : vector<4x4xf32>
    %126 = arith.addf %85, %115 : vector<4x4xf32>
    %c0_105 = arith.constant 0 : index
    %c0_106 = arith.constant 0 : index
    %127 = vector.load %arg13[%c0_105, %c0_106] : memref<4x4xf32, #tpu.memory_space<vmem>>, vector<4x4xf32>
    tpu.vector_store %arg13[%c0_105, %c0_106], %125 {strides = array<i32>} : memref<4x4xf32, #tpu.memory_space<vmem>>, vector<4x4xf32>,
    %c0_107 = arith.constant 0 : index
    %c0_108 = arith.constant 0 : index
    %128 = vector.load %arg14[%c0_107, %c0_108] : memref<4x4xf32, #tpu.memory_space<vmem>>, vector<4x4xf32>
    tpu.vector_store %arg14[%c0_107, %c0_108], %84 {strides = array<i32>} : memref<4x4xf32, #tpu.memory_space<vmem>>, vector<4x4xf32>,
    %c0_109 = arith.constant 0 : index
    %c0_110 = arith.constant 0 : index
    %129 = vector.load %arg15[%c0_109, %c0_110] : memref<4x4xf32, #tpu.memory_space<vmem>>, vector<4x4xf32>
    tpu.vector_store %arg15[%c0_109, %c0_110], %126 {strides = array<i32>} : memref<4x4xf32, #tpu.memory_space<vmem>>, vector<4x4xf32>,
    return
  }
  func.func @transform_0(%arg0: i32) -> (i32, i32) {
    %c0_i32 = arith.constant 0 : i32
    %c0_i32_0 = arith.constant 0 : i32
    return %c0_i32, %arg0 : i32, i32
  }
  func.func @transform_1(%arg0: i32) -> (i32, i32) {
    %c0_i32 = arith.constant 0 : i32
    %c0_i32_0 = arith.constant 0 : i32
    return %c0_i32, %arg0 : i32, i32
  }
  func.func @transform_2(%arg0: i32) -> (i32, i32) {
    %c0_i32 = arith.constant 0 : i32
    %c0_i32_0 = arith.constant 0 : i32
    return %c0_i32, %arg0 : i32, i32
  }
  func.func @transform_3(%arg0: i32) -> (i32, i32, i32) {
    %c0_i32 = arith.constant 0 : i32
    %c0_i32_0 = arith.constant 0 : i32
    %c0_i32_1 = arith.constant 0 : i32
    %c0_i32_2 = arith.constant 0 : i32
    return %c0_i32, %c0_i32_0, %c0_i32_1 : i32, i32, i32
  }
  func.func @transform_4(%arg0: i32) -> (i32, i32, i32) {
    %c0_i32 = arith.constant 0 : i32
    %c0_i32_0 = arith.constant 0 : i32
    %c0_i32_1 = arith.constant 0 : i32
    %c0_i32_2 = arith.constant 0 : i32
    return %c0_i32, %c0_i32_0, %c0_i32_1 : i32, i32, i32
  }
  func.func @transform_5(%arg0: i32) -> (i32, i32, i32) {
    %c0_i32 = arith.constant 0 : i32
    %c0_i32_0 = arith.constant 0 : i32
    %c0_i32_1 = arith.constant 0 : i32
    %c0_i32_2 = arith.constant 0 : i32
    return %c0_i32, %c0_i32_0, %c0_i32_1 : i32, i32, i32
  }
  func.func @transform_6(%arg0: i32) -> (i32, i32, i32) {
    %c0_i32 = arith.constant 0 : i32
    %c0_i32_0 = arith.constant 0 : i32
    %c0_i32_1 = arith.constant 0 : i32
    %c0_i32_2 = arith.constant 0 : i32
    return %c0_i32, %c0_i32_0, %c0_i32_1 : i32, i32, i32
  }
  func.func @transform_7(%arg0: i32) -> (i32, i32, i32) {
    %c0_i32 = arith.constant 0 : i32
    %c0_i32_0 = arith.constant 0 : i32
    %c0_i32_1 = arith.constant 0 : i32
    %c0_i32_2 = arith.constant 0 : i32
    return %c0_i32, %c0_i32_0, %c0_i32_1 : i32, i32, i32
  }
  func.func @transform_8(%arg0: i32) -> (i32, i32, i32) {
    %c0_i32 = arith.constant 0 : i32
    %c0_i32_0 = arith.constant 0 : i32
    %c0_i32_1 = arith.constant 0 : i32
    %c0_i32_2 = arith.constant 0 : i32
    return %c0_i32, %c0_i32_0, %c0_i32_1 : i32, i32, i32
  }
  func.func @transform_9(%arg0: i32) -> (i32, i32, i32) {
    %c0_i32 = arith.constant 0 : i32
    %c0_i32_0 = arith.constant 0 : i32
    %c0_i32_1 = arith.constant 0 : i32
    %c0_i32_2 = arith.constant 0 : i32
    return %c0_i32, %c0_i32_0, %c0_i32_1 : i32, i32, i32
  }
  func.func @transform_10(%arg0: i32) -> (i32, i32, i32) {
    %c0_i32 = arith.constant 0 : i32
    %c0_i32_0 = arith.constant 0 : i32
    %c0_i32_1 = arith.constant 0 : i32
    %c0_i32_2 = arith.constant 0 : i32
    return %c0_i32, %c0_i32_0, %c0_i32_1 : i32, i32, i32
  }
  func.func @transform_11(%arg0: i32) -> (i32, i32, i32) {
    %c0_i32 = arith.constant 0 : i32
    %c0_i32_0 = arith.constant 0 : i32
    %c0_i32_1 = arith.constant 0 : i32
    %c0_i32_2 = arith.constant 0 : i32
    return %c0_i32, %c0_i32_0, %c0_i32_1 : i32, i32, i32
  }
  func.func @transform_12(%arg0: i32) -> (i32, i32) {
    %c0_i32 = arith.constant 0 : i32
    %c0_i32_0 = arith.constant 0 : i32
    return %c0_i32, %arg0 : i32, i32
  }
  func.func @transform_13(%arg0: i32) -> (i32, i32) {
    %c0_i32 = arith.constant 0 : i32
    %c0_i32_0 = arith.constant 0 : i32
    return %c0_i32, %arg0 : i32, i32
  }
  func.func @transform_14(%arg0: i32) -> (i32, i32) {
    %c0_i32 = arith.constant 0 : i32
    %c0_i32_0 = arith.constant 0 : i32
    return %c0_i32, %arg0 : i32, i32
  }
}

</mosaic_0001>

<llo_original>
// kernel: tpu_custom_call.1
$region0: #{tpu_custom_call.1}
  #allocation0 [shape = 'u32[]', space=smem, size = 0x4, offset = 0x4, fixed_abs, tag = 'smem constant byte address 0x4 - core index']
  #allocation1 [shape = 'u32[144,128]{1,0:T(1,128)}', space=vmem, size = 0x12000, scoped, tag = 'internal scratch']
  %s0 = inlined_call_operand.vmem [shape: f32[4,4], index: 0, kind: input, shape index: {}]
  %s1 = inlined_call_operand.vmem [shape: f32[4,4], index: 1, kind: input, shape index: {}]
  %s2 = inlined_call_operand.vmem [shape: f32[6,4], index: 2, kind: input, shape index: {}]
  %s3 = inlined_call_operand.vmem [shape: f32[3,32,4], index: 3, kind: input, shape index: {}]
  %s4 = inlined_call_operand.vmem [shape: f32[3,32,6], index: 4, kind: input, shape index: {}]
  %s5 = inlined_call_operand.vmem [shape: f32[3,32,1], index: 5, kind: input, shape index: {}]
  %s6 = inlined_call_operand.vmem [shape: f32[3,32,32], index: 6, kind: input, shape index: {}]
  %s7 = inlined_call_operand.vmem [shape: f32[3,32,1], index: 7, kind: input, shape index: {}]
  %s8 = inlined_call_operand.vmem [shape: f32[3,4,32], index: 8, kind: input, shape index: {}]
  %s9 = inlined_call_operand.vmem [shape: f32[3,4,1], index: 9, kind: input, shape index: {}]
  %s10 = inlined_call_operand.vmem [shape: f32[3,4,32], index: 10, kind: input, shape index: {}]
  %s11 = inlined_call_operand.vmem [shape: f32[3,4,1], index: 11, kind: input, shape index: {}]
  %s12 = inlined_call_operand.hbm [shape: f32[4,4], index: 12, kind: output, shape index: {0}]
  %s13 = inlined_call_operand.hbm [shape: f32[4,4], index: 13, kind: output, shape index: {1}]
  %s14 = inlined_call_operand.hbm [shape: f32[4,4], index: 14, kind: output, shape index: {2}]
  %15 = xla_tuple %s12, %s13, %s14
  %s16 = sld [smem:[#allocation0]]
  $region74: #{tpu_custom_call.1} parent=0
    _
  %s18 = ssub.s32 1, %s16
  %s19 = scalar_select 0, %s18, %s16
  $region1: #{tpu_custom_call.1} parent=0
    #allocation2 [shape = 'u8[2048]{0}', space=vmem, size = 0x800, scoped, tag = 'output window, operand 0, single buffered']
    #allocation3 [shape = 's32[1]{0}', space=sflag, size = 0x4, scoped, tag = 'scoped memory for tpu_custom_call.1']
    #allocation4 [shape = 'u8[2048]{0}', space=vmem, size = 0x800, scoped, tag = 'output window, operand 1, single buffered']
    #allocation5 [shape = 's32[1]{0}', space=sflag, size = 0x4, scoped, tag = 'scoped memory for tpu_custom_call.1']
    #allocation6 [shape = 'u8[2048]{0}', space=vmem, size = 0x800, scoped, tag = 'output window, operand 2, single buffered']
    %20 = vsyncpa [#allocation3], 0
    %21 = vsyncpa [#allocation5], 0
    // Predicated region
    $region2: #{tpu_custom_call.1} parent=1 // pred_check
      _
    $region3: #{tpu_custom_call.1} parent=1 // pred_check_branch
      %23 = sbr.rel (0) target = $region5
    $region4: #{tpu_custom_call.1} parent=1 // pred_region
      _
    $region5: #{tpu_custom_call.1} parent=1 // pred_fallthru
      _
    // Predicated region
    $region6: #{tpu_custom_call.1} parent=1 // pred_check
      _
    $region7: #{tpu_custom_call.1} parent=1 // pred_check_branch
      %25 = sbr.rel (0) target = $region9
    $region8: #{tpu_custom_call.1} parent=1 // pred_region
      _
    $region9: #{tpu_custom_call.1} parent=1 // pred_fallthru
      _
    // Predicated region
    $region10: #{tpu_custom_call.1} parent=1 // pred_check
      _
    $region11: #{tpu_custom_call.1} parent=1 // pred_check_branch
      %27 = sbr.rel (0) target = $region13
    $region12: #{tpu_custom_call.1} parent=1 // pred_region
      _
    $region13: #{tpu_custom_call.1} parent=1 // pred_fallthru
      _
    // Predicated region
    $region14: #{tpu_custom_call.1} parent=1 // pred_check
      _
    $region15: #{tpu_custom_call.1} parent=1 // pred_check_branch
      %29 = sbr.rel (0) target = $region17
    $region16: #{tpu_custom_call.1} parent=1 // pred_region
      _
    $region17: #{tpu_custom_call.1} parent=1 // pred_fallthru
      _
    // Predicated region
    $region18: #{tpu_custom_call.1} parent=1 // pred_check
      _
    $region19: #{tpu_custom_call.1} parent=1 // pred_check_branch
      %31 = sbr.rel (0) target = $region21
    $region20: #{tpu_custom_call.1} parent=1 // pred_region
      _
    $region21: #{tpu_custom_call.1} parent=1 // pred_fallthru
      _
    // Predicated region
    $region22: #{tpu_custom_call.1} parent=1 // pred_check
      _
    $region23: #{tpu_custom_call.1} parent=1 // pred_check_branch
      %33 = sbr.rel (0) target = $region25
    $region24: #{tpu_custom_call.1} parent=1 // pred_region
      _
    $region25: #{tpu_custom_call.1} parent=1 // pred_fallthru
      _
    // Predicated region
    $region26: #{tpu_custom_call.1} parent=1 // pred_check
      _
    $region27: #{tpu_custom_call.1} parent=1 // pred_check_branch
      %35 = sbr.rel (0) target = $region29
    $region28: #{tpu_custom_call.1} parent=1 // pred_region
      _
    $region29: #{tpu_custom_call.1} parent=1 // pred_fallthru
      _
    // Predicated region
    $region30: #{tpu_custom_call.1} parent=1 // pred_check
      _
    $region31: #{tpu_custom_call.1} parent=1 // pred_check_branch
      %37 = sbr.rel (0) target = $region33
    $region32: #{tpu_custom_call.1} parent=1 // pred_region
      _
    $region33: #{tpu_custom_call.1} parent=1 // pred_fallthru
      _
    // Predicated region
    $region34: #{tpu_custom_call.1} parent=1 // pred_check
      _
    $region35: #{tpu_custom_call.1} parent=1 // pred_check_branch
      %39 = sbr.rel (0) target = $region37
    $region36: #{tpu_custom_call.1} parent=1 // pred_region
      _
    $region37: #{tpu_custom_call.1} parent=1 // pred_fallthru
      _
    // Predicated region
    $region38: #{tpu_custom_call.1} parent=1 // pred_check
      _
    $region39: #{tpu_custom_call.1} parent=1 // pred_check_branch
      %41 = sbr.rel (0) target = $region41
    $region40: #{tpu_custom_call.1} parent=1 // pred_region
      _
    $region41: #{tpu_custom_call.1} parent=1 // pred_fallthru
      _
    // Predicated region
    $region42: #{tpu_custom_call.1} parent=1 // pred_check
      _
    $region43: #{tpu_custom_call.1} parent=1 // pred_check_branch
      %43 = sbr.rel (0) target = $region45
    $region44: #{tpu_custom_call.1} parent=1 // pred_region
      _
    $region45: #{tpu_custom_call.1} parent=1 // pred_fallthru
      _
    // Predicated region
    $region46: #{tpu_custom_call.1} parent=1 // pred_check
      _
    $region47: #{tpu_custom_call.1} parent=1 // pred_check_branch
      %45 = sbr.rel (0) target = $region49
    $region48: #{tpu_custom_call.1} parent=1 // pred_region
      _
    $region49: #{tpu_custom_call.1} parent=1 // pred_fallthru
      _
    %v46 = vld [vmem:[%s0] sm:$0xf]
    %v47 = vld [vmem:[%s1] sm:$0xf]
    %v48 = vld [vmem:[%s2] sm:$0x3f]
    %v49 = vld [vmem:[%s3] sm:$0xff]
    %v50 = vld [vmem:[%s3 + $0x8] sm:$0xff]
    %v51 = vld [vmem:[%s3 + $0x10] sm:$0xff]
    %v52 = vld [vmem:[%s3 + $0x18] sm:$0xff]
    %v53 = vld [vmem:[%s4] sm:$0xff]
    %v54 = vld [vmem:[%s4 + $0x8] sm:$0xff]
    %v55 = vld [vmem:[%s4 + $0x10] sm:$0xff]
    %v56 = vld [vmem:[%s4 + $0x18] sm:$0xff]
    %vm57 = vcmask 48128
    %v59 = vsel %vm57, %v53, 0
    %v62 = vsel %vm57, %v54, 0
    %v65 = vsel %vm57, %v55, 0
    %v68 = vsel %vm57, %v56, 0
    %vm70 = vcmask 1045504
    %v72 = vsel %vm70, %v48, 0
    %74 = vmatprep.subr.mxu0 0.0
    %75 = vmatpush1.msra.mxu0 %v72
    %76 = vmatprep.subr.mxu0 0.0
    %77 = vmatpush1.msra.mxu0 0.0
    %78 = vmatprep.subr.mxu0 0.0
    %79 = vmatpush1.msra.mxu0 0.0
    %80 = vmatprep.subr.mxu0 0.0
    %81 = vmatpush1.msra.mxu0 0.0
    %82 = vmatprep.subr.mxu0 0.0
    %83 = vmatpush1.msra.mxu0 0.0
    %84 = vmatprep.subr.mxu0 0.0
    %85 = vmatpush1.msra.mxu0 0.0
    %86 = vmatprep.subr.mxu0 0.0
    %87 = vmatpush1.msra.mxu0 0.0
    %88 = vmatprep.subr.mxu0 0.0
    %89 = vmatpush1.msra.mxu0 0.0
    %90 = vmatprep.subr.mxu0 0.0
    %91 = vmatpush1.msra.mxu0 0.0
    %92 = vmatprep.subr.mxu0 0.0
    %93 = vmatpush1.msra.mxu0 0.0
    %94 = vmatprep.subr.mxu0 0.0
    %95 = vmatpush1.msra.mxu0 0.0
    %96 = vmatprep.subr.mxu0 0.0
    %97 = vmatpush1.msra.mxu0 0.0
    %98 = vmatprep.subr.mxu0 0.0
    %99 = vmatpush1.msra.mxu0 0.0
    %100 = vmatprep.subr.mxu0 0.0
    %101 = vmatpush1.msra.mxu0 0.0
    %102 = vmatprep.subr.mxu0 0.0
    %103 = vmatpush1.msra.mxu0 0.0
    %104 = vmatprep.subr.mxu0 0.0
    %105 = vmatpush1.msra.mxu0 0.0
    %106 = vmatprep.subr.mxu0 0.0
    %107 = vmatpush1.msra.mxu0 0.0
    %108 = vmatprep.subr.mxu0 0.0
    %109 = vmatpush1.msra.mxu0 0.0
    %110 = vmatprep.subr.mxu0 0.0
    %111 = vmatpush1.msra.mxu0 0.0
    %112 = vmatprep.subr.mxu0 0.0
    %113 = vmatpush1.msra.mxu0 0.0
    %114 = vmatprep.subr.mxu0 0.0
    %115 = vmatpush1.msra.mxu0 0.0
    %116 = vmatprep.subr.mxu0 0.0
    %117 = vmatpush1.msra.mxu0 0.0
    %118 = vmatprep.subr.mxu0 0.0
    %119 = vmatpush1.msra.mxu0 0.0
    %120 = vmatprep.subr.mxu0 0.0
    %121 = vmatpush1.msra.mxu0 0.0
    %122 = vmatprep.subr.mxu0 0.0
    %123 = vmatpush1.msra.mxu0 0.0
    %124 = vmatprep.subr.mxu0 0.0
    %125 = vmatpush1.msra.mxu0 0.0
    %126 = vmatprep.subr.mxu0 0.0
    %127 = vmatpush1.msra.mxu0 0.0
    %128 = vmatprep.subr.mxu0 0.0
    %129 = vmatpush1.msra.mxu0 0.0
    %130 = vmatprep.subr.mxu0 0.0
    %131 = vmatpush1.msra.mxu0 0.0
    %132 = vmatprep.subr.mxu0 0.0
    %133 = vmatpush1.msra.mxu0 0.0
    %134 = vmatprep.subr.mxu0 0.0
    %135 = vmatpush1.msra.mxu0 0.0
    %136 = vmatprep.subr.mxu0 0.0
    %137 = vmatpush1.msra.mxu0 0.0
    %138 = vmatprep.mubr.f32.mxu0 0.0
    %139 = vmatmul.mubr.f32.gmra.mrb[0].mxu0 %v59
    %v140 = vpop.f32.mrb[0].mxu0
    %v141 = vadd.f32 0.0, %v140
    %v142 = vpop.f32.mrb[0].mxu0
    %143 = vmatprep.mubr.f32.mxu0 0.0
    %144 = vmatmul.mubr.f32.gmra.mrb[0].mxu0 %v62
    %v145 = vpop.f32.mrb[0].mxu0
    %v146 = vadd.f32 0.0, %v145
    %v147 = vpop.f32.mrb[0].mxu0
    %148 = vmatprep.mubr.f32.mxu0 0.0
    %149 = vmatmul.mubr.f32.gmra.mrb[0].mxu0 %v65
    %v150 = vpop.f32.mrb[0].mxu0
    %v151 = vadd.f32 0.0, %v150
    %v152 = vpop.f32.mrb[0].mxu0
    %153 = vmatprep.mubr.f32.mxu0 0.0
    %154 = vmatmul.mubr.f32.gmra.mrb[0].mxu0 %v68
    %v155 = vpop.f32.mrb[0].mxu0
    %v156 = vadd.f32 0.0, %v155
    %v157 = vpop.f32.mrb[0].mxu0
    %158 = vdwg.mxu0
    %vm159 = vcmask 31744
    %v161 = vsel %vm159, %v49, 0
    %v164 = vsel %vm159, %v50, 0
    %v167 = vsel %vm159, %v51, 0
    %v170 = vsel %vm159, %v52, 0
    %vm172 = vcmask 1043456
    %v174 = vsel %vm172, %v46, 0
    %176 = vmatprep.subr.mxu0 0.0
    %177 = vmatpush1.msra.mxu0 %v174
    %178 = vmatprep.subr.mxu0 0.0
    %179 = vmatpush1.msra.mxu0 0.0
    %180 = vmatprep.subr.mxu0 0.0
    %181 = vmatpush1.msra.mxu0 0.0
    %182 = vmatprep.subr.mxu0 0.0
    %183 = vmatpush1.msra.mxu0 0.0
    %184 = vmatprep.subr.mxu0 0.0
    %185 = vmatpush1.msra.mxu0 0.0
    %186 = vmatprep.subr.mxu0 0.0
    %187 = vmatpush1.msra.mxu0 0.0
    %188 = vmatprep.subr.mxu0 0.0
    %189 = vmatpush1.msra.mxu0 0.0
    %190 = vmatprep.subr.mxu0 0.0
    %191 = vmatpush1.msra.mxu0 0.0
    %192 = vmatprep.subr.mxu0 0.0
    %193 = vmatpush1.msra.mxu0 0.0
    %194 = vmatprep.subr.mxu0 0.0
    %195 = vmatpush1.msra.mxu0 0.0
    %196 = vmatprep.subr.mxu0 0.0
    %197 = vmatpush1.msra.mxu0 0.0
    %198 = vmatprep.subr.mxu0 0.0
    %199 = vmatpush1.msra.mxu0 0.0
    %200 = vmatprep.subr.mxu0 0.0
    %201 = vmatpush1.msra.mxu0 0.0
    %202 = vmatprep.subr.mxu0 0.0
    %203 = vmatpush1.msra.mxu0 0.0
    %204 = vmatprep.subr.mxu0 0.0
    %205 = vmatpush1.msra.mxu0 0.0
    %206 = vmatprep.subr.mxu0 0.0
    %207 = vmatpush1.msra.mxu0 0.0
    %208 = vmatprep.subr.mxu0 0.0
    %209 = vmatpush1.msra.mxu0 0.0
    %210 = vmatprep.subr.mxu0 0.0
    %211 = vmatpush1.msra.mxu0 0.0
    %212 = vmatprep.subr.mxu0 0.0
    %213 = vmatpush1.msra.mxu0 0.0
    %214 = vmatprep.subr.mxu0 0.0
    %215 = vmatpush1.msra.mxu0 0.0
    %216 = vmatprep.subr.mxu0 0.0
    %217 = vmatpush1.msra.mxu0 0.0
    %218 = vmatprep.subr.mxu0 0.0
    %219 = vmatpush1.msra.mxu0 0.0
    %220 = vmatprep.subr.mxu0 0.0
    %221 = vmatpush1.msra.mxu0 0.0
    %222 = vmatprep.subr.mxu0 0.0
    %223 = vmatpush1.msra.mxu0 0.0
    %224 = vmatprep.subr.mxu0 0.0
    %225 = vmatpush1.msra.mxu0 0.0
    %226 = vmatprep.subr.mxu0 0.0
    %227 = vmatpush1.msra.mxu0 0.0
    %228 = vmatprep.subr.mxu0 0.0
    %229 = vmatpush1.msra.mxu0 0.0
    %230 = vmatprep.subr.mxu0 0.0
    %231 = vmatpush1.msra.mxu0 0.0
    %232 = vmatprep.subr.mxu0 0.0
    %233 = vmatpush1.msra.mxu0 0.0
    %234 = vmatprep.subr.mxu0 0.0
    %235 = vmatpush1.msra.mxu0 0.0
    %236 = vmatprep.subr.mxu0 0.0
    %237 = vmatpush1.msra.mxu0 0.0
    %238 = vmatprep.subr.mxu0 0.0
    %239 = vmatpush1.msra.mxu0 0.0
    %240 = vmatprep.mubr.f32.mxu0 0.0
    %241 = vmatmul.mubr.f32.gmra.mrb[0].mxu0 %v161
    %v242 = vpop.f32.mrb[0].mxu0
    %v243 = vadd.f32 %v141, %v242
    %v244 = vpop.f32.mrb[0].mxu0
    %245 = vmatprep.mubr.f32.mxu0 0.0
    %246 = vmatmul.mubr.f32.gmra.mrb[0].mxu0 %v164
    %v247 = vpop.f32.mrb[0].mxu0
    %v248 = vadd.f32 %v146, %v247
    %v249 = vpop.f32.mrb[0].mxu0
    %250 = vmatprep.mubr.f32.mxu0 0.0
    %251 = vmatmul.mubr.f32.gmra.mrb[0].mxu0 %v167
    %v252 = vpop.f32.mrb[0].mxu0
    %v253 = vadd.f32 %v151, %v252
    %v254 = vpop.f32.mrb[0].mxu0
    %255 = vmatprep.mubr.f32.mxu0 0.0
    %256 = vmatmul.mubr.f32.gmra.mrb[0].mxu0 %v170
    %v257 = vpop.f32.mrb[0].mxu0
    %v258 = vadd.f32 %v156, %v257
    %v259 = vpop.f32.mrb[0].mxu0
    %260 = vdwg.mxu0
    %v261 = vld [vmem:[%s5] sm:$0xff]
    %v262 = vld [vmem:[%s5 + $0x8] sm:$0xff]
    %v263 = vld [vmem:[%s5 + $0x10] sm:$0xff]
    %v264 = vld [vmem:[%s5 + $0x18] sm:$0xff]
    %266 = vset.pattern.permute.xlu0 0
    %267 = vperm.xlu0 %266, %v261
    %v268 = vpop.permute.xlu0 %267
    %271 = vset.pattern.permute.xlu0 0
    %272 = vperm.xlu0 %271, %v262
    %v273 = vpop.permute.xlu0 %272
    %276 = vset.pattern.permute.xlu0 0
    %277 = vperm.xlu0 %276, %v263
    %v278 = vpop.permute.xlu0 %277
    %281 = vset.pattern.permute.xlu0 0
    %282 = vperm.xlu0 %281, %v264
    %v283 = vpop.permute.xlu0 %282
    %v285 = vadd.f32 %v243, %v268
    %v286 = vadd.f32 %v248, %v273
    %v287 = vadd.f32 %v253, %v278
    %v288 = vadd.f32 %v258, %v283
    %v289 = vmax.f32 %v285, 0.0
    %v290 = vmax.f32 %v286, 0.0
    %v291 = vmax.f32 %v287, 0.0
    %v292 = vmax.f32 %v288, 0.0
    %v293 = vld [vmem:[%s6] sm:$0xff]
    %v294 = vld [vmem:[%s6 + $0x8] sm:$0xff]
    %v295 = vld [vmem:[%s6 + $0x10] sm:$0xff]
    %v296 = vld [vmem:[%s6 + $0x18] sm:$0xff]
    %v297 = vld [vmem:[%s7] sm:$0xff]
    %v298 = vld [vmem:[%s7 + $0x8] sm:$0xff]
    %v299 = vld [vmem:[%s7 + $0x10] sm:$0xff]
    %v300 = vld [vmem:[%s7 + $0x18] sm:$0xff]
    %302 = vset.pattern.permute.xlu0 0
    %303 = vperm.xlu0 %302, %v297
    %v304 = vpop.permute.xlu0 %303
    %307 = vset.pattern.permute.xlu0 0
    %308 = vperm.xlu0 %307, %v298
    %v309 = vpop.permute.xlu0 %308
    %312 = vset.pattern.permute.xlu0 0
    %313 = vperm.xlu0 %312, %v299
    %v314 = vpop.permute.xlu0 %313
    %317 = vset.pattern.permute.xlu0 0
    %318 = vperm.xlu0 %317, %v300
    %v319 = vpop.permute.xlu0 %318
    %vm321 = vcmask 261120
    %v323 = vsel %vm321, %v293, 0
    %v326 = vsel %vm321, %v294, 0
    %v329 = vsel %vm321, %v295, 0
    %v332 = vsel %vm321, %v296, 0
    %334 = vmatprep.subr.mxu0 0.0
    %335 = vmatpush1.msra.mxu0 %v289
    %336 = vmatprep.subr.mxu0 0.0
    %337 = vmatpush1.msra.mxu0 %v290
    %338 = vmatprep.subr.mxu0 0.0
    %339 = vmatpush1.msra.mxu0 %v291
    %340 = vmatprep.subr.mxu0 0.0
    %341 = vmatpush1.msra.mxu0 %v292
    %342 = vmatprep.subr.mxu0 0.0
    %343 = vmatpush1.msra.mxu0 0.0
    %344 = vmatprep.subr.mxu0 0.0
    %345 = vmatpush1.msra.mxu0 0.0
    %346 = vmatprep.subr.mxu0 0.0
    %347 = vmatpush1.msra.mxu0 0.0
    %348 = vmatprep.subr.mxu0 0.0
    %349 = vmatpush1.msra.mxu0 0.0
    %350 = vmatprep.subr.mxu0 0.0
    %351 = vmatpush1.msra.mxu0 0.0
    %352 = vmatprep.subr.mxu0 0.0
    %353 = vmatpush1.msra.mxu0 0.0
    %354 = vmatprep.subr.mxu0 0.0
    %355 = vmatpush1.msra.mxu0 0.0
    %356 = vmatprep.subr.mxu0 0.0
    %357 = vmatpush1.msra.mxu0 0.0
    %358 = vmatprep.subr.mxu0 0.0
    %359 = vmatpush1.msra.mxu0 0.0
    %360 = vmatprep.subr.mxu0 0.0
    %361 = vmatpush1.msra.mxu0 0.0
    %362 = vmatprep.subr.mxu0 0.0
    %363 = vmatpush1.msra.mxu0 0.0
    %364 = vmatprep.subr.mxu0 0.0
    %365 = vmatpush1.msra.mxu0 0.0
    %366 = vmatprep.subr.mxu0 0.0
    %367 = vmatpush1.msra.mxu0 0.0
    %368 = vmatprep.subr.mxu0 0.0
    %369 = vmatpush1.msra.mxu0 0.0
    %370 = vmatprep.subr.mxu0 0.0
    %371 = vmatpush1.msra.mxu0 0.0
    %372 = vmatprep.subr.mxu0 0.0
    %373 = vmatpush1.msra.mxu0 0.0
    %374 = vmatprep.subr.mxu0 0.0
    %375 = vmatpush1.msra.mxu0 0.0
    %376 = vmatprep.subr.mxu0 0.0
    %377 = vmatpush1.msra.mxu0 0.0
    %378 = vmatprep.subr.mxu0 0.0
    %379 = vmatpush1.msra.mxu0 0.0
    %380 = vmatprep.subr.mxu0 0.0
    %381 = vmatpush1.msra.mxu0 0.0
    %382 = vmatprep.subr.mxu0 0.0
    %383 = vmatpush1.msra.mxu0 0.0
    %384 = vmatprep.subr.mxu0 0.0
    %385 = vmatpush1.msra.mxu0 0.0
    %386 = vmatprep.subr.mxu0 0.0
    %387 = vmatpush1.msra.mxu0 0.0
    %388 = vmatprep.subr.mxu0 0.0
    %389 = vmatpush1.msra.mxu0 0.0
    %390 = vmatprep.subr.mxu0 0.0
    %391 = vmatpush1.msra.mxu0 0.0
    %392 = vmatprep.subr.mxu0 0.0
    %393 = vmatpush1.msra.mxu0 0.0
    %394 = vmatprep.subr.mxu0 0.0
    %395 = vmatpush1.msra.mxu0 0.0
    %396 = vmatprep.subr.mxu0 0.0
    %397 = vmatpush1.msra.mxu0 0.0
    %398 = vmatprep.mubr.f32.mxu0 0.0
    %399 = vmatmul.mubr.f32.gmra.mrb[0].mxu0 %v323
    %v400 = vpop.f32.mrb[0].mxu0
    %v401 = vadd.f32 %v304, %v400
    %v402 = vpop.f32.mrb[0].mxu0
    %403 = vmatprep.mubr.f32.mxu0 0.0
    %404 = vmatmul.mubr.f32.gmra.mrb[0].mxu0 %v326
    %v405 = vpop.f32.mrb[0].mxu0
    %v406 = vadd.f32 %v309, %v405
    %v407 = vpop.f32.mrb[0].mxu0
    %408 = vmatprep.mubr.f32.mxu0 0.0
    %409 = vmatmul.mubr.f32.gmra.mrb[0].mxu0 %v329
    %v410 = vpop.f32.mrb[0].mxu0
    %v411 = vadd.f32 %v314, %v410
    %v412 = vpop.f32.mrb[0].mxu0
    %413 = vmatprep.mubr.f32.mxu0 0.0
    %414 = vmatmul.mubr.f32.gmra.mrb[0].mxu0 %v332
    %v415 = vpop.f32.mrb[0].mxu0
    %v416 = vadd.f32 %v319, %v415
    %v417 = vpop.f32.mrb[0].mxu0
    %418 = vdwg.mxu0
    %v419 = vmax.f32 %v401, 0.0
    %v420 = vmax.f32 %v406, 0.0
    %v421 = vmax.f32 %v411, 0.0
    %v422 = vmax.f32 %v416, 0.0
    %v423 = vld [vmem:[%s8] sm:$0xf]
    %v424 = vld [vmem:[%s9] sm:$0xf]
    %426 = vset.pattern.permute.xlu0 0
    %427 = vperm.xlu0 %426, %v424
    %v428 = vpop.permute.xlu0 %427
    %v431 = vsel %vm321, %v423, 0
    %433 = vmatprep.subr.mxu0 0.0
    %434 = vmatpush1.msra.mxu0 %v419
    %435 = vmatprep.subr.mxu0 0.0
    %436 = vmatpush1.msra.mxu0 %v420
    %437 = vmatprep.subr.mxu0 0.0
    %438 = vmatpush1.msra.mxu0 %v421
    %439 = vmatprep.subr.mxu0 0.0
    %440 = vmatpush1.msra.mxu0 %v422
    %441 = vmatprep.subr.mxu0 0.0
    %442 = vmatpush1.msra.mxu0 0.0
    %443 = vmatprep.subr.mxu0 0.0
    %444 = vmatpush1.msra.mxu0 0.0
    %445 = vmatprep.subr.mxu0 0.0
    %446 = vmatpush1.msra.mxu0 0.0
    %447 = vmatprep.subr.mxu0 0.0
    %448 = vmatpush1.msra.mxu0 0.0
    %449 = vmatprep.subr.mxu0 0.0
    %450 = vmatpush1.msra.mxu0 0.0
    %451 = vmatprep.subr.mxu0 0.0
    %452 = vmatpush1.msra.mxu0 0.0
    %453 = vmatprep.subr.mxu0 0.0
    %454 = vmatpush1.msra.mxu0 0.0
    %455 = vmatprep.subr.mxu0 0.0
    %456 = vmatpush1.msra.mxu0 0.0
    %457 = vmatprep.subr.mxu0 0.0
    %458 = vmatpush1.msra.mxu0 0.0
    %459 = vmatprep.subr.mxu0 0.0
    %460 = vmatpush1.msra.mxu0 0.0
    %461 = vmatprep.subr.mxu0 0.0
    %462 = vmatpush1.msra.mxu0 0.0
    %463 = vmatprep.subr.mxu0 0.0
    %464 = vmatpush1.msra.mxu0 0.0
    %465 = vmatprep.subr.mxu0 0.0
    %466 = vmatpush1.msra.mxu0 0.0
    %467 = vmatprep.subr.mxu0 0.0
    %468 = vmatpush1.msra.mxu0 0.0
    %469 = vmatprep.subr.mxu0 0.0
    %470 = vmatpush1.msra.mxu0 0.0
    %471 = vmatprep.subr.mxu0 0.0
    %472 = vmatpush1.msra.mxu0 0.0
    %473 = vmatprep.subr.mxu0 0.0
    %474 = vmatpush1.msra.mxu0 0.0
    %475 = vmatprep.subr.mxu0 0.0
    %476 = vmatpush1.msra.mxu0 0.0
    %477 = vmatprep.subr.mxu0 0.0
    %478 = vmatpush1.msra.mxu0 0.0
    %479 = vmatprep.subr.mxu0 0.0
    %480 = vmatpush1.msra.mxu0 0.0
    %481 = vmatprep.subr.mxu0 0.0
    %482 = vmatpush1.msra.mxu0 0.0
    %483 = vmatprep.subr.mxu0 0.0
    %484 = vmatpush1.msra.mxu0 0.0
    %485 = vmatprep.subr.mxu0 0.0
    %486 = vmatpush1.msra.mxu0 0.0
    %487 = vmatprep.subr.mxu0 0.0
    %488 = vmatpush1.msra.mxu0 0.0
    %489 = vmatprep.subr.mxu0 0.0
    %490 = vmatpush1.msra.mxu0 0.0
    %491 = vmatprep.subr.mxu0 0.0
    %492 = vmatpush1.msra.mxu0 0.0
    %493 = vmatprep.subr.mxu0 0.0
    %494 = vmatpush1.msra.mxu0 0.0
    %495 = vmatprep.subr.mxu0 0.0
    %496 = vmatpush1.msra.mxu0 0.0
    %497 = vmatprep.mubr.f32.mxu0 0.0
    %498 = vmatmul.mubr.f32.gmra.mrb[0].mxu0 %v431
    %v499 = vpop.f32.mrb[0].mxu0
    %v500 = vadd.f32 %v428, %v499
    %v501 = vpop.f32.mrb[0].mxu0
    %502 = vdwg.mxu0
    %v503 = vtanh.pop %v500
    %v504 = vld [vmem:[%s10] sm:$0xf]
    %v505 = vld [vmem:[%s11] sm:$0xf]
    %507 = vset.pattern.permute.xlu0 0
    %508 = vperm.xlu0 %507, %v505
    %v509 = vpop.permute.xlu0 %508
    %v512 = vsel %vm321, %v504, 0
    %514 = vmatprep.subr.mxu0 0.0
    %515 = vmatpush1.msra.mxu0 %v419
    %516 = vmatprep.subr.mxu0 0.0
    %517 = vmatpush1.msra.mxu0 %v420
    %518 = vmatprep.subr.mxu0 0.0
    %519 = vmatpush1.msra.mxu0 %v421
    %520 = vmatprep.subr.mxu0 0.0
    %521 = vmatpush1.msra.mxu0 %v422
    %522 = vmatprep.subr.mxu0 0.0
    %523 = vmatpush1.msra.mxu0 0.0
    %524 = vmatprep.subr.mxu0 0.0
    %525 = vmatpush1.msra.mxu0 0.0
    %526 = vmatprep.subr.mxu0 0.0
    %527 = vmatpush1.msra.mxu0 0.0
    %528 = vmatprep.subr.mxu0 0.0
    %529 = vmatpush1.msra.mxu0 0.0
    %530 = vmatprep.subr.mxu0 0.0
    %531 = vmatpush1.msra.mxu0 0.0
    %532 = vmatprep.subr.mxu0 0.0
    %533 = vmatpush1.msra.mxu0 0.0
    %534 = vmatprep.subr.mxu0 0.0
    %535 = vmatpush1.msra.mxu0 0.0
    %536 = vmatprep.subr.mxu0 0.0
    %537 = vmatpush1.msra.mxu0 0.0
    %538 = vmatprep.subr.mxu0 0.0
    %539 = vmatpush1.msra.mxu0 0.0
    %540 = vmatprep.subr.mxu0 0.0
    %541 = vmatpush1.msra.mxu0 0.0
    %542 = vmatprep.subr.mxu0 0.0
    %543 = vmatpush1.msra.mxu0 0.0
    %544 = vmatprep.subr.mxu0 0.0
    %545 = vmatpush1.msra.mxu0 0.0
    %546 = vmatprep.subr.mxu0 0.0
    %547 = vmatpush1.msra.mxu0 0.0
    %548 = vmatprep.subr.mxu0 0.0
    %549 = vmatpush1.msra.mxu0 0.0
    %550 = vmatprep.subr.mxu0 0.0
    %551 = vmatpush1.msra.mxu0 0.0
    %552 = vmatprep.subr.mxu0 0.0
    %553 = vmatpush1.msra.mxu0 0.0
    %554 = vmatprep.subr.mxu0 0.0
    %555 = vmatpush1.msra.mxu0 0.0
    %556 = vmatprep.subr.mxu0 0.0
    %557 = vmatpush1.msra.mxu0 0.0
    %558 = vmatprep.subr.mxu0 0.0
    %559 = vmatpush1.msra.mxu0 0.0
    %560 = vmatprep.subr.mxu0 0.0
    %561 = vmatpush1.msra.mxu0 0.0
    %562 = vmatprep.subr.mxu0 0.0
    %563 = vmatpush1.msra.mxu0 0.0
    %564 = vmatprep.subr.mxu0 0.0
    %565 = vmatpush1.msra.mxu0 0.0
    %566 = vmatprep.subr.mxu0 0.0
    %567 = vmatpush1.msra.mxu0 0.0
    %568 = vmatprep.subr.mxu0 0.0
    %569 = vmatpush1.msra.mxu0 0.0
    %570 = vmatprep.subr.mxu0 0.0
    %571 = vmatpush1.msra.mxu0 0.0
    %572 = vmatprep.subr.mxu0 0.0
    %573 = vmatpush1.msra.mxu0 0.0
    %574 = vmatprep.subr.mxu0 0.0
    %575 = vmatpush1.msra.mxu0 0.0
    %576 = vmatprep.subr.mxu0 0.0
    %577 = vmatpush1.msra.mxu0 0.0
    %578 = vmatprep.mubr.f32.mxu0 0.0
    %579 = vmatmul.mubr.f32.gmra.mrb[0].mxu0 %v512
    %v580 = vpop.f32.mrb[0].mxu0
    %v581 = vadd.f32 %v509, %v580
    %v582 = vpop.f32.mrb[0].mxu0
    %583 = vdwg.mxu0
    %v584 = vmul.f32 %v503, 1.442695
    %v585 = vpow.pop %v584
    %v586 = vmul.f32 %v585, %v47
    %v587 = vadd.f32 %v586, %v581
    %v588 = vadd.f32 %v503, 0.0
    %s589 = scalar_lea.vmem %s3, 32
    %v590 = vld [vmem:[%s589] sm:$0xff]
    %v591 = vld [vmem:[%s589 + $0x8] sm:$0xff]
    %v592 = vld [vmem:[%s589 + $0x10] sm:$0xff]
    %v593 = vld [vmem:[%s589 + $0x18] sm:$0xff]
    %s594 = scalar_lea.vmem %s4, 32
    %v595 = vld [vmem:[%s594] sm:$0xff]
    %v596 = vld [vmem:[%s594 + $0x8] sm:$0xff]
    %v597 = vld [vmem:[%s594 + $0x10] sm:$0xff]
    %v598 = vld [vmem:[%s594 + $0x18] sm:$0xff]
    %v600 = vsel %vm57, %v595, 0
    %v603 = vsel %vm57, %v596, 0
    %v606 = vsel %vm57, %v597, 0
    %v609 = vsel %vm57, %v598, 0
    %611 = vmatprep.subr.mxu0 0.0
    %612 = vmatpush1.msra.mxu0 %v72
    %613 = vmatprep.subr.mxu0 0.0
    %614 = vmatpush1.msra.mxu0 0.0
    %615 = vmatprep.subr.mxu0 0.0
    %616 = vmatpush1.msra.mxu0 0.0
    %617 = vmatprep.subr.mxu0 0.0
    %618 = vmatpush1.msra.mxu0 0.0
    %619 = vmatprep.subr.mxu0 0.0
    %620 = vmatpush1.msra.mxu0 0.0
    %621 = vmatprep.subr.mxu0 0.0
    %622 = vmatpush1.msra.mxu0 0.0
    %623 = vmatprep.subr.mxu0 0.0
    %624 = vmatpush1.msra.mxu0 0.0
    %625 = vmatprep.subr.mxu0 0.0
    %626 = vmatpush1.msra.mxu0 0.0
    %627 = vmatprep.subr.mxu0 0.0
    %628 = vmatpush1.msra.mxu0 0.0
    %629 = vmatprep.subr.mxu0 0.0
    %630 = vmatpush1.msra.mxu0 0.0
    %631 = vmatprep.subr.mxu0 0.0
    %632 = vmatpush1.msra.mxu0 0.0
    %633 = vmatprep.subr.mxu0 0.0
    %634 = vmatpush1.msra.mxu0 0.0
    %635 = vmatprep.subr.mxu0 0.0
    %636 = vmatpush1.msra.mxu0 0.0
    %637 = vmatprep.subr.mxu0 0.0
    %638 = vmatpush1.msra.mxu0 0.0
    %639 = vmatprep.subr.mxu0 0.0
    %640 = vmatpush1.msra.mxu0 0.0
    %641 = vmatprep.subr.mxu0 0.0
    %642 = vmatpush1.msra.mxu0 0.0
    %643 = vmatprep.subr.mxu0 0.0
    %644 = vmatpush1.msra.mxu0 0.0
    %645 = vmatprep.subr.mxu0 0.0
    %646 = vmatpush1.msra.mxu0 0.0
    %647 = vmatprep.subr.mxu0 0.0
    %648 = vmatpush1.msra.mxu0 0.0
    %649 = vmatprep.subr.mxu0 0.0
    %650 = vmatpush1.msra.mxu0 0.0
    %651 = vmatprep.subr.mxu0 0.0
    %652 = vmatpush1.msra.mxu0 0.0
    %653 = vmatprep.subr.mxu0 0.0
    %654 = vmatpush1.msra.mxu0 0.0
    %655 = vmatprep.subr.mxu0 0.0
    %656 = vmatpush1.msra.mxu0 0.0
    %657 = vmatprep.subr.mxu0 0.0
    %658 = vmatpush1.msra.mxu0 0.0
    %659 = vmatprep.subr.mxu0 0.0
    %660 = vmatpush1.msra.mxu0 0.0
    %661 = vmatprep.subr.mxu0 0.0
    %662 = vmatpush1.msra.mxu0 0.0
    %663 = vmatprep.subr.mxu0 0.0
    %664 = vmatpush1.msra.mxu0 0.0
    %665 = vmatprep.subr.mxu0 0.0
    %666 = vmatpush1.msra.mxu0 0.0
    %667 = vmatprep.subr.mxu0 0.0
    %668 = vmatpush1.msra.mxu0 0.0
    %669 = vmatprep.subr.mxu0 0.0
    %670 = vmatpush1.msra.mxu0 0.0
    %671 = vmatprep.subr.mxu0 0.0
    %672 = vmatpush1.msra.mxu0 0.0
    %673 = vmatprep.subr.mxu0 0.0
    %674 = vmatpush1.msra.mxu0 0.0
    %675 = vmatprep.mubr.f32.mxu0 0.0
    %676 = vmatmul.mubr.f32.gmra.mrb[0].mxu0 %v600
    %v677 = vpop.f32.mrb[0].mxu0
    %v678 = vadd.f32 0.0, %v677
    %v679 = vpop.f32.mrb[0].mxu0
    %680 = vmatprep.mubr.f32.mxu0 0.0
    %681 = vmatmul.mubr.f32.gmra.mrb[0].mxu0 %v603
    %v682 = vpop.f32.mrb[0].mxu0
    %v683 = vadd.f32 0.0, %v682
    %v684 = vpop.f32.mrb[0].mxu0
    %685 = vmatprep.mubr.f32.mxu0 0.0
    %686 = vmatmul.mubr.f32.gmra.mrb[0].mxu0 %v606
    %v687 = vpop.f32.mrb[0].mxu0
    %v688 = vadd.f32 0.0, %v687
    %v689 = vpop.f32.mrb[0].mxu0
    %690 = vmatprep.mubr.f32.mxu0 0.0
    %691 = vmatmul.mubr.f32.gmra.mrb[0].mxu0 %v609
    %v692 = vpop.f32.mrb[0].mxu0
    %v693 = vadd.f32 0.0, %v692
    %v694 = vpop.f32.mrb[0].mxu0
    %695 = vdwg.mxu0
    %v697 = vsel %vm159, %v590, 0
    %v700 = vsel %vm159, %v591, 0
    %v703 = vsel %vm159, %v592, 0
    %v706 = vsel %vm159, %v593, 0
    %v709 = vsel %vm172, %v587, 0
    %711 = vmatprep.subr.mxu0 0.0
    %712 = vmatpush1.msra.mxu0 %v709
    %713 = vmatprep.subr.mxu0 0.0
    %714 = vmatpush1.msra.mxu0 0.0
    %715 = vmatprep.subr.mxu0 0.0
    %716 = vmatpush1.msra.mxu0 0.0
    %717 = vmatprep.subr.mxu0 0.0
    %718 = vmatpush1.msra.mxu0 0.0
    %719 = vmatprep.subr.mxu0 0.0
    %720 = vmatpush1.msra.mxu0 0.0
    %721 = vmatprep.subr.mxu0 0.0
    %722 = vmatpush1.msra.mxu0 0.0
    %723 = vmatprep.subr.mxu0 0.0
    %724 = vmatpush1.msra.mxu0 0.0
    %725 = vmatprep.subr.mxu0 0.0
    %726 = vmatpush1.msra.mxu0 0.0
    %727 = vmatprep.subr.mxu0 0.0
    %728 = vmatpush1.msra.mxu0 0.0
    %729 = vmatprep.subr.mxu0 0.0
    %730 = vmatpush1.msra.mxu0 0.0
    %731 = vmatprep.subr.mxu0 0.0
    %732 = vmatpush1.msra.mxu0 0.0
    %733 = vmatprep.subr.mxu0 0.0
    %734 = vmatpush1.msra.mxu0 0.0
    %735 = vmatprep.subr.mxu0 0.0
    %736 = vmatpush1.msra.mxu0 0.0
    %737 = vmatprep.subr.mxu0 0.0
    %738 = vmatpush1.msra.mxu0 0.0
    %739 = vmatprep.subr.mxu0 0.0
    %740 = vmatpush1.msra.mxu0 0.0
    %741 = vmatprep.subr.mxu0 0.0
    %742 = vmatpush1.msra.mxu0 0.0
    %743 = vmatprep.subr.mxu0 0.0
    %744 = vmatpush1.msra.mxu0 0.0
    %745 = vmatprep.subr.mxu0 0.0
    %746 = vmatpush1.msra.mxu0 0.0
    %747 = vmatprep.subr.mxu0 0.0
    %748 = vmatpush1.msra.mxu0 0.0
    %749 = vmatprep.subr.mxu0 0.0
    %750 = vmatpush1.msra.mxu0 0.0
    %751 = vmatprep.subr.mxu0 0.0
    %752 = vmatpush1.msra.mxu0 0.0
    %753 = vmatprep.subr.mxu0 0.0
    %754 = vmatpush1.msra.mxu0 0.0
    %755 = vmatprep.subr.mxu0 0.0
    %756 = vmatpush1.msra.mxu0 0.0
    %757 = vmatprep.subr.mxu0 0.0
    %758 = vmatpush1.msra.mxu0 0.0
    %759 = vmatprep.subr.mxu0 0.0
    %760 = vmatpush1.msra.mxu0 0.0
    %761 = vmatprep.subr.mxu0 0.0
    %762 = vmatpush1.msra.mxu0 0.0
    %763 = vmatprep.subr.mxu0 0.0
    %764 = vmatpush1.msra.mxu0 0.0
    %765 = vmatprep.subr.mxu0 0.0
    %766 = vmatpush1.msra.mxu0 0.0
    %767 = vmatprep.subr.mxu0 0.0
    %768 = vmatpush1.msra.mxu0 0.0
    %769 = vmatprep.subr.mxu0 0.0
    %770 = vmatpush1.msra.mxu0 0.0
    %771 = vmatprep.subr.mxu0 0.0
    %772 = vmatpush1.msra.mxu0 0.0
    %773 = vmatprep.subr.mxu0 0.0
    %774 = vmatpush1.msra.mxu0 0.0
    %775 = vmatprep.mubr.f32.mxu0 0.0
    %776 = vmatmul.mubr.f32.gmra.mrb[0].mxu0 %v697
    %v777 = vpop.f32.mrb[0].mxu0
    %v778 = vadd.f32 %v678, %v777
    %v779 = vpop.f32.mrb[0].mxu0
    %780 = vmatprep.mubr.f32.mxu0 0.0
    %781 = vmatmul.mubr.f32.gmra.mrb[0].mxu0 %v700
    %v782 = vpop.f32.mrb[0].mxu0
    %v783 = vadd.f32 %v683, %v782
    %v784 = vpop.f32.mrb[0].mxu0
    %785 = vmatprep.mubr.f32.mxu0 0.0
    %786 = vmatmul.mubr.f32.gmra.mrb[0].mxu0 %v703
    %v787 = vpop.f32.mrb[0].mxu0
    %v788 = vadd.f32 %v688, %v787
    %v789 = vpop.f32.mrb[0].mxu0
    %790 = vmatprep.mubr.f32.mxu0 0.0
    %791 = vmatmul.mubr.f32.gmra.mrb[0].mxu0 %v706
    %v792 = vpop.f32.mrb[0].mxu0
    %v793 = vadd.f32 %v693, %v792
    %v794 = vpop.f32.mrb[0].mxu0
    %795 = vdwg.mxu0
    %s796 = scalar_lea.vmem %s5, 32
    %v797 = vld [vmem:[%s796] sm:$0xff]
    %v798 = vld [vmem:[%s796 + $0x8] sm:$0xff]
    %v799 = vld [vmem:[%s796 + $0x10] sm:$0xff]
    %v800 = vld [vmem:[%s796 + $0x18] sm:$0xff]
    %802 = vset.pattern.permute.xlu0 0
    %803 = vperm.xlu0 %802, %v797
    %v804 = vpop.permute.xlu0 %803
    %807 = vset.pattern.permute.xlu0 0
    %808 = vperm.xlu0 %807, %v798
    %v809 = vpop.permute.xlu0 %808
    %812 = vset.pattern.permute.xlu0 0
    %813 = vperm.xlu0 %812, %v799
    %v814 = vpop.permute.xlu0 %813
    %817 = vset.pattern.permute.xlu0 0
    %818 = vperm.xlu0 %817, %v800
    %v819 = vpop.permute.xlu0 %818
    %v821 = vadd.f32 %v778, %v804
    %v822 = vadd.f32 %v783, %v809
    %v823 = vadd.f32 %v788, %v814
    %v824 = vadd.f32 %v793, %v819
    %v825 = vmax.f32 %v821, 0.0
    %v826 = vmax.f32 %v822, 0.0
    %v827 = vmax.f32 %v823, 0.0
    %v828 = vmax.f32 %v824, 0.0
    %s829 = scalar_lea.vmem %s6, 32
    %v830 = vld [vmem:[%s829] sm:$0xff]
    %v831 = vld [vmem:[%s829 + $0x8] sm:$0xff]
    %v832 = vld [vmem:[%s829 + $0x10] sm:$0xff]
    %v833 = vld [vmem:[%s829 + $0x18] sm:$0xff]
    %s834 = scalar_lea.vmem %s7, 32
    %v835 = vld [vmem:[%s834] sm:$0xff]
    %v836 = vld [vmem:[%s834 + $0x8] sm:$0xff]
    %v837 = vld [vmem:[%s834 + $0x10] sm:$0xff]
    %v838 = vld [vmem:[%s834 + $0x18] sm:$0xff]
    %840 = vset.pattern.permute.xlu0 0
    %841 = vperm.xlu0 %840, %v835
    %v842 = vpop.permute.xlu0 %841
    %845 = vset.pattern.permute.xlu0 0
    %846 = vperm.xlu0 %845, %v836
    %v847 = vpop.permute.xlu0 %846
    %850 = vset.pattern.permute.xlu0 0
    %851 = vperm.xlu0 %850, %v837
    %v852 = vpop.permute.xlu0 %851
    %855 = vset.pattern.permute.xlu0 0
    %856 = vperm.xlu0 %855, %v838
    %v857 = vpop.permute.xlu0 %856
    %v860 = vsel %vm321, %v830, 0
    %v863 = vsel %vm321, %v831, 0
    %v866 = vsel %vm321, %v832, 0
    %v869 = vsel %vm321, %v833, 0
    %871 = vmatprep.subr.mxu0 0.0
    %872 = vmatpush1.msra.mxu0 %v825
    %873 = vmatprep.subr.mxu0 0.0
    %874 = vmatpush1.msra.mxu0 %v826
    %875 = vmatprep.subr.mxu0 0.0
    %876 = vmatpush1.msra.mxu0 %v827
    %877 = vmatprep.subr.mxu0 0.0
    %878 = vmatpush1.msra.mxu0 %v828
    %879 = vmatprep.subr.mxu0 0.0
    %880 = vmatpush1.msra.mxu0 0.0
    %881 = vmatprep.subr.mxu0 0.0
    %882 = vmatpush1.msra.mxu0 0.0
    %883 = vmatprep.subr.mxu0 0.0
    %884 = vmatpush1.msra.mxu0 0.0
    %885 = vmatprep.subr.mxu0 0.0
    %886 = vmatpush1.msra.mxu0 0.0
    %887 = vmatprep.subr.mxu0 0.0
    %888 = vmatpush1.msra.mxu0 0.0
    %889 = vmatprep.subr.mxu0 0.0
    %890 = vmatpush1.msra.mxu0 0.0
    %891 = vmatprep.subr.mxu0 0.0
    %892 = vmatpush1.msra.mxu0 0.0
    %893 = vmatprep.subr.mxu0 0.0
    %894 = vmatpush1.msra.mxu0 0.0
    %895 = vmatprep.subr.mxu0 0.0
    %896 = vmatpush1.msra.mxu0 0.0
    %897 = vmatprep.subr.mxu0 0.0
    %898 = vmatpush1.msra.mxu0 0.0
    %899 = vmatprep.subr.mxu0 0.0
    %900 = vmatpush1.msra.mxu0 0.0
    %901 = vmatprep.subr.mxu0 0.0
    %902 = vmatpush1.msra.mxu0 0.0
    %903 = vmatprep.subr.mxu0 0.0
    %904 = vmatpush1.msra.mxu0 0.0
    %905 = vmatprep.subr.mxu0 0.0
    %906 = vmatpush1.msra.mxu0 0.0
    %907 = vmatprep.subr.mxu0 0.0
    %908 = vmatpush1.msra.mxu0 0.0
    %909 = vmatprep.subr.mxu0 0.0
    %910 = vmatpush1.msra.mxu0 0.0
    %911 = vmatprep.subr.mxu0 0.0
    %912 = vmatpush1.msra.mxu0 0.0
    %913 = vmatprep.subr.mxu0 0.0
    %914 = vmatpush1.msra.mxu0 0.0
    %915 = vmatprep.subr.mxu0 0.0
    %916 = vmatpush1.msra.mxu0 0.0
    %917 = vmatprep.subr.mxu0 0.0
    %918 = vmatpush1.msra.mxu0 0.0
    %919 = vmatprep.subr.mxu0 0.0
    %920 = vmatpush1.msra.mxu0 0.0
    %921 = vmatprep.subr.mxu0 0.0
    %922 = vmatpush1.msra.mxu0 0.0
    %923 = vmatprep.subr.mxu0 0.0
    %924 = vmatpush1.msra.mxu0 0.0
    %925 = vmatprep.subr.mxu0 0.0
    %926 = vmatpush1.msra.mxu0 0.0
    %927 = vmatprep.subr.mxu0 0.0
    %928 = vmatpush1.msra.mxu0 0.0
    %929 = vmatprep.subr.mxu0 0.0
    %930 = vmatpush1.msra.mxu0 0.0
    %931 = vmatprep.subr.mxu0 0.0
    %932 = vmatpush1.msra.mxu0 0.0
    %933 = vmatprep.subr.mxu0 0.0
    %934 = vmatpush1.msra.mxu0 0.0
    %935 = vmatprep.mubr.f32.mxu0 0.0
    %936 = vmatmul.mubr.f32.gmra.mrb[0].mxu0 %v860
    %v937 = vpop.f32.mrb[0].mxu0
    %v938 = vadd.f32 %v842, %v937
    %v939 = vpop.f32.mrb[0].mxu0
    %940 = vmatprep.mubr.f32.mxu0 0.0
    %941 = vmatmul.mubr.f32.gmra.mrb[0].mxu0 %v863
    %v942 = vpop.f32.mrb[0].mxu0
    %v943 = vadd.f32 %v847, %v942
    %v944 = vpop.f32.mrb[0].mxu0
    %945 = vmatprep.mubr.f32.mxu0 0.0
    %946 = vmatmul.mubr.f32.gmra.mrb[0].mxu0 %v866
    %v947 = vpop.f32.mrb[0].mxu0
    %v948 = vadd.f32 %v852, %v947
    %v949 = vpop.f32.mrb[0].mxu0
    %950 = vmatprep.mubr.f32.mxu0 0.0
    %951 = vmatmul.mubr.f32.gmra.mrb[0].mxu0 %v869
    %v952 = vpop.f32.mrb[0].mxu0
    %v953 = vadd.f32 %v857, %v952
    %v954 = vpop.f32.mrb[0].mxu0
    %955 = vdwg.mxu0
    %v956 = vmax.f32 %v938, 0.0
    %v957 = vmax.f32 %v943, 0.0
    %v958 = vmax.f32 %v948, 0.0
    %v959 = vmax.f32 %v953, 0.0
    %s960 = scalar_lea.vmem %s8, 4
    %v961 = vld [vmem:[%s960] sm:$0xf]
    %s962 = scalar_lea.vmem %s9, 4
    %v963 = vld [vmem:[%s962] sm:$0xf]
    %965 = vset.pattern.permute.xlu0 0
    %966 = vperm.xlu0 %965, %v963
    %v967 = vpop.permute.xlu0 %966
    %v970 = vsel %vm321, %v961, 0
    %972 = vmatprep.subr.mxu0 0.0
    %973 = vmatpush1.msra.mxu0 %v956
    %974 = vmatprep.subr.mxu0 0.0
    %975 = vmatpush1.msra.mxu0 %v957
    %976 = vmatprep.subr.mxu0 0.0
    %977 = vmatpush1.msra.mxu0 %v958
    %978 = vmatprep.subr.mxu0 0.0
    %979 = vmatpush1.msra.mxu0 %v959
    %980 = vmatprep.subr.mxu0 0.0
    %981 = vmatpush1.msra.mxu0 0.0
    %982 = vmatprep.subr.mxu0 0.0
    %983 = vmatpush1.msra.mxu0 0.0
    %984 = vmatprep.subr.mxu0 0.0
    %985 = vmatpush1.msra.mxu0 0.0
    %986 = vmatprep.subr.mxu0 0.0
    %987 = vmatpush1.msra.mxu0 0.0
    %988 = vmatprep.subr.mxu0 0.0
    %989 = vmatpush1.msra.mxu0 0.0
    %990 = vmatprep.subr.mxu0 0.0
    %991 = vmatpush1.msra.mxu0 0.0
    %992 = vmatprep.subr.mxu0 0.0
    %993 = vmatpush1.msra.mxu0 0.0
    %994 = vmatprep.subr.mxu0 0.0
    %995 = vmatpush1.msra.mxu0 0.0
    %996 = vmatprep.subr.mxu0 0.0
    %997 = vmatpush1.msra.mxu0 0.0
    %998 = vmatprep.subr.mxu0 0.0
    %999 = vmatpush1.msra.mxu0 0.0
    %1000 = vmatprep.subr.mxu0 0.0
    %1001 = vmatpush1.msra.mxu0 0.0
    %1002 = vmatprep.subr.mxu0 0.0
    %1003 = vmatpush1.msra.mxu0 0.0
    %1004 = vmatprep.subr.mxu0 0.0
    %1005 = vmatpush1.msra.mxu0 0.0
    %1006 = vmatprep.subr.mxu0 0.0
    %1007 = vmatpush1.msra.mxu0 0.0
    %1008 = vmatprep.subr.mxu0 0.0
    %1009 = vmatpush1.msra.mxu0 0.0
    %1010 = vmatprep.subr.mxu0 0.0
    %1011 = vmatpush1.msra.mxu0 0.0
    %1012 = vmatprep.subr.mxu0 0.0
    %1013 = vmatpush1.msra.mxu0 0.0
    %1014 = vmatprep.subr.mxu0 0.0
    %1015 = vmatpush1.msra.mxu0 0.0
    %1016 = vmatprep.subr.mxu0 0.0
    %1017 = vmatpush1.msra.mxu0 0.0
    %1018 = vmatprep.subr.mxu0 0.0
    %1019 = vmatpush1.msra.mxu0 0.0
    %1020 = vmatprep.subr.mxu0 0.0
    %1021 = vmatpush1.msra.mxu0 0.0
    %1022 = vmatprep.subr.mxu0 0.0
    %1023 = vmatpush1.msra.mxu0 0.0
    %1024 = vmatprep.subr.mxu0 0.0
    %1025 = vmatpush1.msra.mxu0 0.0
    %1026 = vmatprep.subr.mxu0 0.0
    %1027 = vmatpush1.msra.mxu0 0.0
    %1028 = vmatprep.subr.mxu0 0.0
    %1029 = vmatpush1.msra.mxu0 0.0
    %1030 = vmatprep.subr.mxu0 0.0
    %1031 = vmatpush1.msra.mxu0 0.0
    %1032 = vmatprep.subr.mxu0 0.0
    %1033 = vmatpush1.msra.mxu0 0.0
    %1034 = vmatprep.subr.mxu0 0.0
    %1035 = vmatpush1.msra.mxu0 0.0
    %1036 = vmatprep.mubr.f32.mxu0 0.0
    %1037 = vmatmul.mubr.f32.gmra.mrb[0].mxu0 %v970
    %v1038 = vpop.f32.mrb[0].mxu0
    %v1039 = vadd.f32 %v967, %v1038
    %v1040 = vpop.f32.mrb[0].mxu0
    %1041 = vdwg.mxu0
    %v1042 = vtanh.pop %v1039
    %s1043 = scalar_lea.vmem %s10, 4
    %v1044 = vld [vmem:[%s1043] sm:$0xf]
    %s1045 = scalar_lea.vmem %s11, 4
    %v1046 = vld [vmem:[%s1045] sm:$0xf]
    %1048 = vset.pattern.permute.xlu0 0
    %1049 = vperm.xlu0 %1048, %v1046
    %v1050 = vpop.permute.xlu0 %1049
    %v1053 = vsel %vm321, %v1044, 0
    %1055 = vmatprep.subr.mxu0 0.0
    %1056 = vmatpush1.msra.mxu0 %v956
    %1057 = vmatprep.subr.mxu0 0.0
    %1058 = vmatpush1.msra.mxu0 %v957
    %1059 = vmatprep.subr.mxu0 0.0
    %1060 = vmatpush1.msra.mxu0 %v958
    %1061 = vmatprep.subr.mxu0 0.0
    %1062 = vmatpush1.msra.mxu0 %v959
    %1063 = vmatprep.subr.mxu0 0.0
    %1064 = vmatpush1.msra.mxu0 0.0
    %1065 = vmatprep.subr.mxu0 0.0
    %1066 = vmatpush1.msra.mxu0 0.0
    %1067 = vmatprep.subr.mxu0 0.0
    %1068 = vmatpush1.msra.mxu0 0.0
    %1069 = vmatprep.subr.mxu0 0.0
    %1070 = vmatpush1.msra.mxu0 0.0
    %1071 = vmatprep.subr.mxu0 0.0
    %1072 = vmatpush1.msra.mxu0 0.0
    %1073 = vmatprep.subr.mxu0 0.0
    %1074 = vmatpush1.msra.mxu0 0.0
    %1075 = vmatprep.subr.mxu0 0.0
    %1076 = vmatpush1.msra.mxu0 0.0
    %1077 = vmatprep.subr.mxu0 0.0
    %1078 = vmatpush1.msra.mxu0 0.0
    %1079 = vmatprep.subr.mxu0 0.0
    %1080 = vmatpush1.msra.mxu0 0.0
    %1081 = vmatprep.subr.mxu0 0.0
    %1082 = vmatpush1.msra.mxu0 0.0
    %1083 = vmatprep.subr.mxu0 0.0
    %1084 = vmatpush1.msra.mxu0 0.0
    %1085 = vmatprep.subr.mxu0 0.0
    %1086 = vmatpush1.msra.mxu0 0.0
    %1087 = vmatprep.subr.mxu0 0.0
    %1088 = vmatpush1.msra.mxu0 0.0
    %1089 = vmatprep.subr.mxu0 0.0
    %1090 = vmatpush1.msra.mxu0 0.0
    %1091 = vmatprep.subr.mxu0 0.0
    %1092 = vmatpush1.msra.mxu0 0.0
    %1093 = vmatprep.subr.mxu0 0.0
    %1094 = vmatpush1.msra.mxu0 0.0
    %1095 = vmatprep.subr.mxu0 0.0
    %1096 = vmatpush1.msra.mxu0 0.0
    %1097 = vmatprep.subr.mxu0 0.0
    %1098 = vmatpush1.msra.mxu0 0.0
    %1099 = vmatprep.subr.mxu0 0.0
    %1100 = vmatpush1.msra.mxu0 0.0
    %1101 = vmatprep.subr.mxu0 0.0
    %1102 = vmatpush1.msra.mxu0 0.0
    %1103 = vmatprep.subr.mxu0 0.0
    %1104 = vmatpush1.msra.mxu0 0.0
    %1105 = vmatprep.subr.mxu0 0.0
    %1106 = vmatpush1.msra.mxu0 0.0
    %1107 = vmatprep.subr.mxu0 0.0
    %1108 = vmatpush1.msra.mxu0 0.0
    %1109 = vmatprep.subr.mxu0 0.0
    %1110 = vmatpush1.msra.mxu0 0.0
    %1111 = vmatprep.subr.mxu0 0.0
    %1112 = vmatpush1.msra.mxu0 0.0
    %1113 = vmatprep.subr.mxu0 0.0
    %1114 = vmatpush1.msra.mxu0 0.0
    %1115 = vmatprep.subr.mxu0 0.0
    %1116 = vmatpush1.msra.mxu0 0.0
    %1117 = vmatprep.subr.mxu0 0.0
    %1118 = vmatpush1.msra.mxu0 0.0
    %1119 = vmatprep.mubr.f32.mxu0 0.0
    %1120 = vmatmul.mubr.f32.gmra.mrb[0].mxu0 %v1053
    %v1121 = vpop.f32.mrb[0].mxu0
    %v1122 = vadd.f32 %v1050, %v1121
    %v1123 = vpop.f32.mrb[0].mxu0
    %1124 = vdwg.mxu0
    %v1125 = vmul.f32 %v1042, 1.442695
    %v1126 = vpow.pop %v1125
    %v1127 = vmul.f32 %v1126, %v46
    %v1128 = vadd.f32 %v1127, %v1122
    %v1129 = vadd.f32 %v588, %v1042
    %s1130 = scalar_lea.vmem %s3, 64
    %v1131 = vld [vmem:[%s1130] sm:$0xff]
    %v1132 = vld [vmem:[%s1130 + $0x8] sm:$0xff]
    %v1133 = vld [vmem:[%s1130 + $0x10] sm:$0xff]
    %v1134 = vld [vmem:[%s1130 + $0x18] sm:$0xff]
    %s1135 = scalar_lea.vmem %s4, 64
    %v1136 = vld [vmem:[%s1135] sm:$0xff]
    %v1137 = vld [vmem:[%s1135 + $0x8] sm:$0xff]
    %v1138 = vld [vmem:[%s1135 + $0x10] sm:$0xff]
    %v1139 = vld [vmem:[%s1135 + $0x18] sm:$0xff]
    %v1141 = vsel %vm57, %v1136, 0
    %v1144 = vsel %vm57, %v1137, 0
    %v1147 = vsel %vm57, %v1138, 0
    %v1150 = vsel %vm57, %v1139, 0
    %1152 = vmatprep.subr.mxu0 0.0
    %1153 = vmatpush1.msra.mxu0 %v72
    %1154 = vmatprep.subr.mxu0 0.0
    %1155 = vmatpush1.msra.mxu0 0.0
    %1156 = vmatprep.subr.mxu0 0.0
    %1157 = vmatpush1.msra.mxu0 0.0
    %1158 = vmatprep.subr.mxu0 0.0
    %1159 = vmatpush1.msra.mxu0 0.0
    %1160 = vmatprep.subr.mxu0 0.0
    %1161 = vmatpush1.msra.mxu0 0.0
    %1162 = vmatprep.subr.mxu0 0.0
    %1163 = vmatpush1.msra.mxu0 0.0
    %1164 = vmatprep.subr.mxu0 0.0
    %1165 = vmatpush1.msra.mxu0 0.0
    %1166 = vmatprep.subr.mxu0 0.0
    %1167 = vmatpush1.msra.mxu0 0.0
    %1168 = vmatprep.subr.mxu0 0.0
    %1169 = vmatpush1.msra.mxu0 0.0
    %1170 = vmatprep.subr.mxu0 0.0
    %1171 = vmatpush1.msra.mxu0 0.0
    %1172 = vmatprep.subr.mxu0 0.0
    %1173 = vmatpush1.msra.mxu0 0.0
    %1174 = vmatprep.subr.mxu0 0.0
    %1175 = vmatpush1.msra.mxu0 0.0
    %1176 = vmatprep.subr.mxu0 0.0
    %1177 = vmatpush1.msra.mxu0 0.0
    %1178 = vmatprep.subr.mxu0 0.0
    %1179 = vmatpush1.msra.mxu0 0.0
    %1180 = vmatprep.subr.mxu0 0.0
    %1181 = vmatpush1.msra.mxu0 0.0
    %1182 = vmatprep.subr.mxu0 0.0
    %1183 = vmatpush1.msra.mxu0 0.0
    %1184 = vmatprep.subr.mxu0 0.0
    %1185 = vmatpush1.msra.mxu0 0.0
    %1186 = vmatprep.subr.mxu0 0.0
    %1187 = vmatpush1.msra.mxu0 0.0
    %1188 = vmatprep.subr.mxu0 0.0
    %1189 = vmatpush1.msra.mxu0 0.0
    %1190 = vmatprep.subr.mxu0 0.0
    %1191 = vmatpush1.msra.mxu0 0.0
    %1192 = vmatprep.subr.mxu0 0.0
    %1193 = vmatpush1.msra.mxu0 0.0
    %1194 = vmatprep.subr.mxu0 0.0
    %1195 = vmatpush1.msra.mxu0 0.0
    %1196 = vmatprep.subr.mxu0 0.0
    %1197 = vmatpush1.msra.mxu0 0.0
    %1198 = vmatprep.subr.mxu0 0.0
    %1199 = vmatpush1.msra.mxu0 0.0
    %1200 = vmatprep.subr.mxu0 0.0
    %1201 = vmatpush1.msra.mxu0 0.0
    %1202 = vmatprep.subr.mxu0 0.0
    %1203 = vmatpush1.msra.mxu0 0.0
    %1204 = vmatprep.subr.mxu0 0.0
    %1205 = vmatpush1.msra.mxu0 0.0
    %1206 = vmatprep.subr.mxu0 0.0
    %1207 = vmatpush1.msra.mxu0 0.0
    %1208 = vmatprep.subr.mxu0 0.0
    %1209 = vmatpush1.msra.mxu0 0.0
    %1210 = vmatprep.subr.mxu0 0.0
    %1211 = vmatpush1.msra.mxu0 0.0
    %1212 = vmatprep.subr.mxu0 0.0
    %1213 = vmatpush1.msra.mxu0 0.0
    %1214 = vmatprep.subr.mxu0 0.0
    %1215 = vmatpush1.msra.mxu0 0.0
    %1216 = vmatprep.mubr.f32.mxu0 0.0
    %1217 = vmatmul.mubr.f32.gmra.mrb[0].mxu0 %v1141
    %v1218 = vpop.f32.mrb[0].mxu0
    %v1219 = vadd.f32 0.0, %v1218
    %v1220 = vpop.f32.mrb[0].mxu0
    %1221 = vmatprep.mubr.f32.mxu0 0.0
    %1222 = vmatmul.mubr.f32.gmra.mrb[0].mxu0 %v1144
    %v1223 = vpop.f32.mrb[0].mxu0
    %v1224 = vadd.f32 0.0, %v1223
    %v1225 = vpop.f32.mrb[0].mxu0
    %1226 = vmatprep.mubr.f32.mxu0 0.0
    %1227 = vmatmul.mubr.f32.gmra.mrb[0].mxu0 %v1147
    %v1228 = vpop.f32.mrb[0].mxu0
    %v1229 = vadd.f32 0.0, %v1228
    %v1230 = vpop.f32.mrb[0].mxu0
    %1231 = vmatprep.mubr.f32.mxu0 0.0
    %1232 = vmatmul.mubr.f32.gmra.mrb[0].mxu0 %v1150
    %v1233 = vpop.f32.mrb[0].mxu0
    %v1234 = vadd.f32 0.0, %v1233
    %v1235 = vpop.f32.mrb[0].mxu0
    %1236 = vdwg.mxu0
    %v1238 = vsel %vm159, %v1131, 0
    %v1241 = vsel %vm159, %v1132, 0
    %v1244 = vsel %vm159, %v1133, 0
    %v1247 = vsel %vm159, %v1134, 0
    %v1250 = vsel %vm172, %v1128, 0
    %1252 = vmatprep.subr.mxu0 0.0
    %1253 = vmatpush1.msra.mxu0 %v1250
    %1254 = vmatprep.subr.mxu0 0.0
    %1255 = vmatpush1.msra.mxu0 0.0
    %1256 = vmatprep.subr.mxu0 0.0
    %1257 = vmatpush1.msra.mxu0 0.0
    %1258 = vmatprep.subr.mxu0 0.0
    %1259 = vmatpush1.msra.mxu0 0.0
    %1260 = vmatprep.subr.mxu0 0.0
    %1261 = vmatpush1.msra.mxu0 0.0
    %1262 = vmatprep.subr.mxu0 0.0
    %1263 = vmatpush1.msra.mxu0 0.0
    %1264 = vmatprep.subr.mxu0 0.0
    %1265 = vmatpush1.msra.mxu0 0.0
    %1266 = vmatprep.subr.mxu0 0.0
    %1267 = vmatpush1.msra.mxu0 0.0
    %1268 = vmatprep.subr.mxu0 0.0
    %1269 = vmatpush1.msra.mxu0 0.0
    %1270 = vmatprep.subr.mxu0 0.0
    %1271 = vmatpush1.msra.mxu0 0.0
    %1272 = vmatprep.subr.mxu0 0.0
    %1273 = vmatpush1.msra.mxu0 0.0
    %1274 = vmatprep.subr.mxu0 0.0
    %1275 = vmatpush1.msra.mxu0 0.0
    %1276 = vmatprep.subr.mxu0 0.0
    %1277 = vmatpush1.msra.mxu0 0.0
    %1278 = vmatprep.subr.mxu0 0.0
    %1279 = vmatpush1.msra.mxu0 0.0
    %1280 = vmatprep.subr.mxu0 0.0
    %1281 = vmatpush1.msra.mxu0 0.0
    %1282 = vmatprep.subr.mxu0 0.0
    %1283 = vmatpush1.msra.mxu0 0.0
    %1284 = vmatprep.subr.mxu0 0.0
    %1285 = vmatpush1.msra.mxu0 0.0
    %1286 = vmatprep.subr.mxu0 0.0
    %1287 = vmatpush1.msra.mxu0 0.0
    %1288 = vmatprep.subr.mxu0 0.0
    %1289 = vmatpush1.msra.mxu0 0.0
    %1290 = vmatprep.subr.mxu0 0.0
    %1291 = vmatpush1.msra.mxu0 0.0
    %1292 = vmatprep.subr.mxu0 0.0
    %1293 = vmatpush1.msra.mxu0 0.0
    %1294 = vmatprep.subr.mxu0 0.0
    %1295 = vmatpush1.msra.mxu0 0.0
    %1296 = vmatprep.subr.mxu0 0.0
    %1297 = vmatpush1.msra.mxu0 0.0
    %1298 = vmatprep.subr.mxu0 0.0
    %1299 = vmatpush1.msra.mxu0 0.0
    %1300 = vmatprep.subr.mxu0 0.0
    %1301 = vmatpush1.msra.mxu0 0.0
    %1302 = vmatprep.subr.mxu0 0.0
    %1303 = vmatpush1.msra.mxu0 0.0
    %1304 = vmatprep.subr.mxu0 0.0
    %1305 = vmatpush1.msra.mxu0 0.0
    %1306 = vmatprep.subr.mxu0 0.0
    %1307 = vmatpush1.msra.mxu0 0.0
    %1308 = vmatprep.subr.mxu0 0.0
    %1309 = vmatpush1.msra.mxu0 0.0
    %1310 = vmatprep.subr.mxu0 0.0
    %1311 = vmatpush1.msra.mxu0 0.0
    %1312 = vmatprep.subr.mxu0 0.0
    %1313 = vmatpush1.msra.mxu0 0.0
    %1314 = vmatprep.subr.mxu0 0.0
    %1315 = vmatpush1.msra.mxu0 0.0
    %1316 = vmatprep.mubr.f32.mxu0 0.0
    %1317 = vmatmul.mubr.f32.gmra.mrb[0].mxu0 %v1238
    %v1318 = vpop.f32.mrb[0].mxu0
    %v1319 = vadd.f32 %v1219, %v1318
    %v1320 = vpop.f32.mrb[0].mxu0
    %1321 = vmatprep.mubr.f32.mxu0 0.0
    %1322 = vmatmul.mubr.f32.gmra.mrb[0].mxu0 %v1241
    %v1323 = vpop.f32.mrb[0].mxu0
    %v1324 = vadd.f32 %v1224, %v1323
    %v1325 = vpop.f32.mrb[0].mxu0
    %1326 = vmatprep.mubr.f32.mxu0 0.0
    %1327 = vmatmul.mubr.f32.gmra.mrb[0].mxu0 %v1244
    %v1328 = vpop.f32.mrb[0].mxu0
    %v1329 = vadd.f32 %v1229, %v1328
    %v1330 = vpop.f32.mrb[0].mxu0
    %1331 = vmatprep.mubr.f32.mxu0 0.0
    %1332 = vmatmul.mubr.f32.gmra.mrb[0].mxu0 %v1247
    %v1333 = vpop.f32.mrb[0].mxu0
    %v1334 = vadd.f32 %v1234, %v1333
    %v1335 = vpop.f32.mrb[0].mxu0
    %1336 = vdwg.mxu0
    %s1337 = scalar_lea.vmem %s5, 64
    %v1338 = vld [vmem:[%s1337] sm:$0xff]
    %v1339 = vld [vmem:[%s1337 + $0x8] sm:$0xff]
    %v1340 = vld [vmem:[%s1337 + $0x10] sm:$0xff]
    %v1341 = vld [vmem:[%s1337 + $0x18] sm:$0xff]
    %1343 = vset.pattern.permute.xlu0 0
    %1344 = vperm.xlu0 %1343, %v1338
    %v1345 = vpop.permute.xlu0 %1344
    %1348 = vset.pattern.permute.xlu0 0
    %1349 = vperm.xlu0 %1348, %v1339
    %v1350 = vpop.permute.xlu0 %1349
    %1353 = vset.pattern.permute.xlu0 0
    %1354 = vperm.xlu0 %1353, %v1340
    %v1355 = vpop.permute.xlu0 %1354
    %1358 = vset.pattern.permute.xlu0 0
    %1359 = vperm.xlu0 %1358, %v1341
    %v1360 = vpop.permute.xlu0 %1359
    %v1362 = vadd.f32 %v1319, %v1345
    %v1363 = vadd.f32 %v1324, %v1350
    %v1364 = vadd.f32 %v1329, %v1355
    %v1365 = vadd.f32 %v1334, %v1360
    %v1366 = vmax.f32 %v1362, 0.0
    %v1367 = vmax.f32 %v1363, 0.0
    %v1368 = vmax.f32 %v1364, 0.0
    %v1369 = vmax.f32 %v1365, 0.0
    %s1370 = scalar_lea.vmem %s6, 64
    %v1371 = vld [vmem:[%s1370] sm:$0xff]
    %v1372 = vld [vmem:[%s1370 + $0x8] sm:$0xff]
    %v1373 = vld [vmem:[%s1370 + $0x10] sm:$0xff]
    %v1374 = vld [vmem:[%s1370 + $0x18] sm:$0xff]
    %s1375 = scalar_lea.vmem %s7, 64
    %v1376 = vld [vmem:[%s1375] sm:$0xff]
    %v1377 = vld [vmem:[%s1375 + $0x8] sm:$0xff]
    %v1378 = vld [vmem:[%s1375 + $0x10] sm:$0xff]
    %v1379 = vld [vmem:[%s1375 + $0x18] sm:$0xff]
    %1381 = vset.pattern.permute.xlu0 0
    %1382 = vperm.xlu0 %1381, %v1376
    %v1383 = vpop.permute.xlu0 %1382
    %1386 = vset.pattern.permute.xlu0 0
    %1387 = vperm.xlu0 %1386, %v1377
    %v1388 = vpop.permute.xlu0 %1387
    %1391 = vset.pattern.permute.xlu0 0
    %1392 = vperm.xlu0 %1391, %v1378
    %v1393 = vpop.permute.xlu0 %1392
    %1396 = vset.pattern.permute.xlu0 0
    %1397 = vperm.xlu0 %1396, %v1379
    %v1398 = vpop.permute.xlu0 %1397
    %v1401 = vsel %vm321, %v1371, 0
    %v1404 = vsel %vm321, %v1372, 0
    %v1407 = vsel %vm321, %v1373, 0
    %v1410 = vsel %vm321, %v1374, 0
    %1412 = vmatprep.subr.mxu0 0.0
    %1413 = vmatpush1.msra.mxu0 %v1366
    %1414 = vmatprep.subr.mxu0 0.0
    %1415 = vmatpush1.msra.mxu0 %v1367
    %1416 = vmatprep.subr.mxu0 0.0
    %1417 = vmatpush1.msra.mxu0 %v1368
    %1418 = vmatprep.subr.mxu0 0.0
    %1419 = vmatpush1.msra.mxu0 %v1369
    %1420 = vmatprep.subr.mxu0 0.0
    %1421 = vmatpush1.msra.mxu0 0.0
    %1422 = vmatprep.subr.mxu0 0.0
    %1423 = vmatpush1.msra.mxu0 0.0
    %1424 = vmatprep.subr.mxu0 0.0
    %1425 = vmatpush1.msra.mxu0 0.0
    %1426 = vmatprep.subr.mxu0 0.0
    %1427 = vmatpush1.msra.mxu0 0.0
    %1428 = vmatprep.subr.mxu0 0.0
    %1429 = vmatpush1.msra.mxu0 0.0
    %1430 = vmatprep.subr.mxu0 0.0
    %1431 = vmatpush1.msra.mxu0 0.0
    %1432 = vmatprep.subr.mxu0 0.0
    %1433 = vmatpush1.msra.mxu0 0.0
    %1434 = vmatprep.subr.mxu0 0.0
    %1435 = vmatpush1.msra.mxu0 0.0
    %1436 = vmatprep.subr.mxu0 0.0
    %1437 = vmatpush1.msra.mxu0 0.0
    %1438 = vmatprep.subr.mxu0 0.0
    %1439 = vmatpush1.msra.mxu0 0.0
    %1440 = vmatprep.subr.mxu0 0.0
    %1441 = vmatpush1.msra.mxu0 0.0
    %1442 = vmatprep.subr.mxu0 0.0
    %1443 = vmatpush1.msra.mxu0 0.0
    %1444 = vmatprep.subr.mxu0 0.0
    %1445 = vmatpush1.msra.mxu0 0.0
    %1446 = vmatprep.subr.mxu0 0.0
    %1447 = vmatpush1.msra.mxu0 0.0
    %1448 = vmatprep.subr.mxu0 0.0
    %1449 = vmatpush1.msra.mxu0 0.0
    %1450 = vmatprep.subr.mxu0 0.0
    %1451 = vmatpush1.msra.mxu0 0.0
    %1452 = vmatprep.subr.mxu0 0.0
    %1453 = vmatpush1.msra.mxu0 0.0
    %1454 = vmatprep.subr.mxu0 0.0
    %1455 = vmatpush1.msra.mxu0 0.0
    %1456 = vmatprep.subr.mxu0 0.0
    %1457 = vmatpush1.msra.mxu0 0.0
    %1458 = vmatprep.subr.mxu0 0.0
    %1459 = vmatpush1.msra.mxu0 0.0
    %1460 = vmatprep.subr.mxu0 0.0
    %1461 = vmatpush1.msra.mxu0 0.0
    %1462 = vmatprep.subr.mxu0 0.0
    %1463 = vmatpush1.msra.mxu0 0.0
    %1464 = vmatprep.subr.mxu0 0.0
    %1465 = vmatpush1.msra.mxu0 0.0
    %1466 = vmatprep.subr.mxu0 0.0
    %1467 = vmatpush1.msra.mxu0 0.0
    %1468 = vmatprep.subr.mxu0 0.0
    %1469 = vmatpush1.msra.mxu0 0.0
    %1470 = vmatprep.subr.mxu0 0.0
    %1471 = vmatpush1.msra.mxu0 0.0
    %1472 = vmatprep.subr.mxu0 0.0
    %1473 = vmatpush1.msra.mxu0 0.0
    %1474 = vmatprep.subr.mxu0 0.0
    %1475 = vmatpush1.msra.mxu0 0.0
    %1476 = vmatprep.mubr.f32.mxu0 0.0
    %1477 = vmatmul.mubr.f32.gmra.mrb[0].mxu0 %v1401
    %v1478 = vpop.f32.mrb[0].mxu0
    %v1479 = vadd.f32 %v1383, %v1478
    %v1480 = vpop.f32.mrb[0].mxu0
    %1481 = vmatprep.mubr.f32.mxu0 0.0
    %1482 = vmatmul.mubr.f32.gmra.mrb[0].mxu0 %v1404
    %v1483 = vpop.f32.mrb[0].mxu0
    %v1484 = vadd.f32 %v1388, %v1483
    %v1485 = vpop.f32.mrb[0].mxu0
    %1486 = vmatprep.mubr.f32.mxu0 0.0
    %1487 = vmatmul.mubr.f32.gmra.mrb[0].mxu0 %v1407
    %v1488 = vpop.f32.mrb[0].mxu0
    %v1489 = vadd.f32 %v1393, %v1488
    %v1490 = vpop.f32.mrb[0].mxu0
    %1491 = vmatprep.mubr.f32.mxu0 0.0
    %1492 = vmatmul.mubr.f32.gmra.mrb[0].mxu0 %v1410
    %v1493 = vpop.f32.mrb[0].mxu0
    %v1494 = vadd.f32 %v1398, %v1493
    %v1495 = vpop.f32.mrb[0].mxu0
    %1496 = vdwg.mxu0
    %v1497 = vmax.f32 %v1479, 0.0
    %v1498 = vmax.f32 %v1484, 0.0
    %v1499 = vmax.f32 %v1489, 0.0
    %v1500 = vmax.f32 %v1494, 0.0
    %s1501 = scalar_lea.vmem %s8, 8
    %v1502 = vld [vmem:[%s1501] sm:$0xf]
    %s1503 = scalar_lea.vmem %s9, 8
    %v1504 = vld [vmem:[%s1503] sm:$0xf]
    %1506 = vset.pattern.permute.xlu0 0
    %1507 = vperm.xlu0 %1506, %v1504
    %v1508 = vpop.permute.xlu0 %1507
    %v1511 = vsel %vm321, %v1502, 0
    %1513 = vmatprep.subr.mxu0 0.0
    %1514 = vmatpush1.msra.mxu0 %v1497
    %1515 = vmatprep.subr.mxu0 0.0
    %1516 = vmatpush1.msra.mxu0 %v1498
    %1517 = vmatprep.subr.mxu0 0.0
    %1518 = vmatpush1.msra.mxu0 %v1499
    %1519 = vmatprep.subr.mxu0 0.0
    %1520 = vmatpush1.msra.mxu0 %v1500
    %1521 = vmatprep.subr.mxu0 0.0
    %1522 = vmatpush1.msra.mxu0 0.0
    %1523 = vmatprep.subr.mxu0 0.0
    %1524 = vmatpush1.msra.mxu0 0.0
    %1525 = vmatprep.subr.mxu0 0.0
    %1526 = vmatpush1.msra.mxu0 0.0
    %1527 = vmatprep.subr.mxu0 0.0
    %1528 = vmatpush1.msra.mxu0 0.0
    %1529 = vmatprep.subr.mxu0 0.0
    %1530 = vmatpush1.msra.mxu0 0.0
    %1531 = vmatprep.subr.mxu0 0.0
    %1532 = vmatpush1.msra.mxu0 0.0
    %1533 = vmatprep.subr.mxu0 0.0
    %1534 = vmatpush1.msra.mxu0 0.0
    %1535 = vmatprep.subr.mxu0 0.0
    %1536 = vmatpush1.msra.mxu0 0.0
    %1537 = vmatprep.subr.mxu0 0.0
    %1538 = vmatpush1.msra.mxu0 0.0
    %1539 = vmatprep.subr.mxu0 0.0
    %1540 = vmatpush1.msra.mxu0 0.0
    %1541 = vmatprep.subr.mxu0 0.0
    %1542 = vmatpush1.msra.mxu0 0.0
    %1543 = vmatprep.subr.mxu0 0.0
    %1544 = vmatpush1.msra.mxu0 0.0
    %1545 = vmatprep.subr.mxu0 0.0
    %1546 = vmatpush1.msra.mxu0 0.0
    %1547 = vmatprep.subr.mxu0 0.0
    %1548 = vmatpush1.msra.mxu0 0.0
    %1549 = vmatprep.subr.mxu0 0.0
    %1550 = vmatpush1.msra.mxu0 0.0
    %1551 = vmatprep.subr.mxu0 0.0
    %1552 = vmatpush1.msra.mxu0 0.0
    %1553 = vmatprep.subr.mxu0 0.0
    %1554 = vmatpush1.msra.mxu0 0.0
    %1555 = vmatprep.subr.mxu0 0.0
    %1556 = vmatpush1.msra.mxu0 0.0
    %1557 = vmatprep.subr.mxu0 0.0
    %1558 = vmatpush1.msra.mxu0 0.0
    %1559 = vmatprep.subr.mxu0 0.0
    %1560 = vmatpush1.msra.mxu0 0.0
    %1561 = vmatprep.subr.mxu0 0.0
    %1562 = vmatpush1.msra.mxu0 0.0
    %1563 = vmatprep.subr.mxu0 0.0
    %1564 = vmatpush1.msra.mxu0 0.0
    %1565 = vmatprep.subr.mxu0 0.0
    %1566 = vmatpush1.msra.mxu0 0.0
    %1567 = vmatprep.subr.mxu0 0.0
    %1568 = vmatpush1.msra.mxu0 0.0
    %1569 = vmatprep.subr.mxu0 0.0
    %1570 = vmatpush1.msra.mxu0 0.0
    %1571 = vmatprep.subr.mxu0 0.0
    %1572 = vmatpush1.msra.mxu0 0.0
    %1573 = vmatprep.subr.mxu0 0.0
    %1574 = vmatpush1.msra.mxu0 0.0
    %1575 = vmatprep.subr.mxu0 0.0
    %1576 = vmatpush1.msra.mxu0 0.0
    %1577 = vmatprep.mubr.f32.mxu0 0.0
    %1578 = vmatmul.mubr.f32.gmra.mrb[0].mxu0 %v1511
    %v1579 = vpop.f32.mrb[0].mxu0
    %v1580 = vadd.f32 %v1508, %v1579
    %v1581 = vpop.f32.mrb[0].mxu0
    %1582 = vdwg.mxu0
    %v1583 = vtanh.pop %v1580
    %s1584 = scalar_lea.vmem %s10, 8
    %v1585 = vld [vmem:[%s1584] sm:$0xf]
    %s1586 = scalar_lea.vmem %s11, 8
    %v1587 = vld [vmem:[%s1586] sm:$0xf]
    %1589 = vset.pattern.permute.xlu0 0
    %1590 = vperm.xlu0 %1589, %v1587
    %v1591 = vpop.permute.xlu0 %1590
    %v1594 = vsel %vm321, %v1585, 0
    %1596 = vmatprep.subr.mxu0 0.0
    %1597 = vmatpush1.msra.mxu0 %v1497
    %1598 = vmatprep.subr.mxu0 0.0
    %1599 = vmatpush1.msra.mxu0 %v1498
    %1600 = vmatprep.subr.mxu0 0.0
    %1601 = vmatpush1.msra.mxu0 %v1499
    %1602 = vmatprep.subr.mxu0 0.0
    %1603 = vmatpush1.msra.mxu0 %v1500
    %1604 = vmatprep.subr.mxu0 0.0
    %1605 = vmatpush1.msra.mxu0 0.0
    %1606 = vmatprep.subr.mxu0 0.0
    %1607 = vmatpush1.msra.mxu0 0.0
    %1608 = vmatprep.subr.mxu0 0.0
    %1609 = vmatpush1.msra.mxu0 0.0
    %1610 = vmatprep.subr.mxu0 0.0
    %1611 = vmatpush1.msra.mxu0 0.0
    %1612 = vmatprep.subr.mxu0 0.0
    %1613 = vmatpush1.msra.mxu0 0.0
    %1614 = vmatprep.subr.mxu0 0.0
    %1615 = vmatpush1.msra.mxu0 0.0
    %1616 = vmatprep.subr.mxu0 0.0
    %1617 = vmatpush1.msra.mxu0 0.0
    %1618 = vmatprep.subr.mxu0 0.0
    %1619 = vmatpush1.msra.mxu0 0.0
    %1620 = vmatprep.subr.mxu0 0.0
    %1621 = vmatpush1.msra.mxu0 0.0
    %1622 = vmatprep.subr.mxu0 0.0
    %1623 = vmatpush1.msra.mxu0 0.0
    %1624 = vmatprep.subr.mxu0 0.0
    %1625 = vmatpush1.msra.mxu0 0.0
    %1626 = vmatprep.subr.mxu0 0.0
    %1627 = vmatpush1.msra.mxu0 0.0
    %1628 = vmatprep.subr.mxu0 0.0
    %1629 = vmatpush1.msra.mxu0 0.0
    %1630 = vmatprep.subr.mxu0 0.0
    %1631 = vmatpush1.msra.mxu0 0.0
    %1632 = vmatprep.subr.mxu0 0.0
    %1633 = vmatpush1.msra.mxu0 0.0
    %1634 = vmatprep.subr.mxu0 0.0
    %1635 = vmatpush1.msra.mxu0 0.0
    %1636 = vmatprep.subr.mxu0 0.0
    %1637 = vmatpush1.msra.mxu0 0.0
    %1638 = vmatprep.subr.mxu0 0.0
    %1639 = vmatpush1.msra.mxu0 0.0
    %1640 = vmatprep.subr.mxu0 0.0
    %1641 = vmatpush1.msra.mxu0 0.0
    %1642 = vmatprep.subr.mxu0 0.0
    %1643 = vmatpush1.msra.mxu0 0.0
    %1644 = vmatprep.subr.mxu0 0.0
    %1645 = vmatpush1.msra.mxu0 0.0
    %1646 = vmatprep.subr.mxu0 0.0
    %1647 = vmatpush1.msra.mxu0 0.0
    %1648 = vmatprep.subr.mxu0 0.0
    %1649 = vmatpush1.msra.mxu0 0.0
    %1650 = vmatprep.subr.mxu0 0.0
    %1651 = vmatpush1.msra.mxu0 0.0
    %1652 = vmatprep.subr.mxu0 0.0
    %1653 = vmatpush1.msra.mxu0 0.0
    %1654 = vmatprep.subr.mxu0 0.0
    %1655 = vmatpush1.msra.mxu0 0.0
    %1656 = vmatprep.subr.mxu0 0.0
    %1657 = vmatpush1.msra.mxu0 0.0
    %1658 = vmatprep.subr.mxu0 0.0
    %1659 = vmatpush1.msra.mxu0 0.0
    %1660 = vmatprep.mubr.f32.mxu0 0.0
    %1661 = vmatmul.mubr.f32.gmra.mrb[0].mxu0 %v1594
    %v1662 = vpop.f32.mrb[0].mxu0
    %v1663 = vadd.f32 %v1591, %v1662
    %v1664 = vpop.f32.mrb[0].mxu0
    %1665 = vdwg.mxu0
    %v1666 = vmul.f32 %v1583, 1.442695
    %v1667 = vpow.pop %v1666
    %v1668 = vmul.f32 %v1667, %v587
    %v1669 = vadd.f32 %v1668, %v1663
    %v1670 = vadd.f32 %v1129, %v1583
    %vm1671 = vcmask 27648
    %1672 = vst.msk [vmem:[#allocation2] sm:$0xf] %vm1671, %v1669
    %1673 = vst.msk [vmem:[#allocation4] sm:$0xf] %vm1671, %v1128
    %1674 = vst.msk [vmem:[#allocation6] sm:$0xf] %vm1671, %v1670
    // Predicated region
    $region50: #{tpu_custom_call.1} parent=1 // pred_check
      _
    $region51: #{tpu_custom_call.1} parent=1 // pred_check_branch
      %1676 = sbr.rel (0) target = $region53
    $region52: #{tpu_custom_call.1} parent=1 // pred_region
      %s1678 = ssub.s32 64, 64
      %1679 = vsyncadd [#allocation3], %s1678
      %s1681 = sshll.u32 [#allocation2], 4
      %s1682 = int_to_ptr.vmem [resolvable:$true] %s1681
      %1684 = dma.vmem_to_hbm [thread:$0]  %s1682, 64, %s12, [#allocation3]
    $region53: #{tpu_custom_call.1} parent=1 // pred_fallthru
      _
    // Predicated region
    $region54: #{tpu_custom_call.1} parent=1 // pred_check
      _
    $region55: #{tpu_custom_call.1} parent=1 // pred_check_branch
      %1686 = sbr.rel (0) target = $region57
    $region56: #{tpu_custom_call.1} parent=1 // pred_region
      %s1688 = ssub.s32 64, 64
      %1689 = vsyncadd [#allocation5], %s1688
      %s1691 = sshll.u32 [#allocation4], 4
      %s1692 = int_to_ptr.vmem [resolvable:$true] %s1691
      %1694 = dma.vmem_to_hbm [thread:$0]  %s1692, 64, %s13, [#allocation5]
    $region57: #{tpu_custom_call.1} parent=1 // pred_fallthru
      _
    // Predicated region
    $region58: #{tpu_custom_call.1} parent=1 // pred_check
      _
    $region59: #{tpu_custom_call.1} parent=1 // pred_check_branch
      %1696 = sbr.rel (0) target = $region61
    $region60: #{tpu_custom_call.1} parent=1 // pred_region
      %s1698 = ssub.s32 64, 64
      %1699 = vsyncadd [#allocation5], %s1698
      %s1701 = sshll.u32 [#allocation6], 4
      %s1702 = int_to_ptr.vmem [resolvable:$true] %s1701
      %1704 = dma.vmem_to_hbm [thread:$0]  %s1702, 64, %s14, [#allocation5]
    $region61: #{tpu_custom_call.1} parent=1 // pred_fallthru
      _
    // Predicated region
    $region62: #{tpu_custom_call.1} parent=1 // pred_check
      _
    $region63: #{tpu_custom_call.1} parent=1 // pred_check_branch
      %1706 = sbr.rel (0) target = $region65
    $region64: #{tpu_custom_call.1} parent=1 // pred_region
      %1707 = dma.done [#allocation3], 64
    $region65: #{tpu_custom_call.1} parent=1 // pred_fallthru
      _
    // Predicated region
    $region66: #{tpu_custom_call.1} parent=1 // pred_check
      _
    $region67: #{tpu_custom_call.1} parent=1 // pred_check_branch
      %1709 = sbr.rel (0) target = $region69
    $region68: #{tpu_custom_call.1} parent=1 // pred_region
      %1710 = dma.done [#allocation5], 64
    $region69: #{tpu_custom_call.1} parent=1 // pred_fallthru
      _
    // Predicated region
    $region70: #{tpu_custom_call.1} parent=1 // pred_check
      _
    $region71: #{tpu_custom_call.1} parent=1 // pred_check_branch
      %1712 = sbr.rel (0) target = $region73
    $region72: #{tpu_custom_call.1} parent=1 // pred_region
      %1713 = dma.done [#allocation5], 64
    $region73: #{tpu_custom_call.1} parent=1 // pred_fallthru
      _
    %1714 = vsyncpa [#allocation3], 1
    %1715 = vsyncpa [#allocation5], 1

</llo_original>
